<compile_context>
chip_gen: v5e
topology: v5e:2x2
jax: 0.10.0
libtpu: 0.0.40
codegen_flags: <defaults>
</compile_context>

<pallas_src>
import functools

import jax
import jax.numpy as jnp
from jax.experimental import pallas as pl
from jax.experimental.pallas import tpu as pltpu


# -----------------------------------------------------------------------------
# Kernel
# -----------------------------------------------------------------------------
def led_forward_kernel(n, hidden_dim,
                       x_ref,
                       we1_ref, be1_ref, we2_ref, be2_ref,
                       w0xf_ref, b0f_ref,            # layer-0, step 0:     (L, 4H), (1, 4H)
                       w0xr_ref, w0h_ref, b0r_ref,   # layer-0, steps >= 1: (H, 4H) x2, (1, 4H)  (wfc folded)
                       w1x_ref, w1h_ref, b1_ref,     # layer-1:             (H, 4H) x2, (1, 4H)
                       wfc_ref, bfc_ref,
                       wd1_ref, bd1_ref, wd2_ref, bd2_ref,
                       out_ref):
    f32 = jnp.float32
    bf16 = jnp.bfloat16
    H = hidden_dim

    x = x_ref[...].astype(bf16)                                        # (B_blk, C*F)
    B = x.shape[0]

    # --- AE encoder: Flatten -> Linear(C*F, 64) -> ReLU -> Linear(64, latent) ---
    h_enc = jnp.maximum(
        jnp.dot(x, we1_ref[...], preferred_element_type=f32) + be1_ref[...], 0.0)
    z = jnp.dot(h_enc.astype(bf16), we2_ref[...],
                preferred_element_type=f32) + be2_ref[...]             # (B, L) f32

    # Fused gate tensor layout along 4H lanes: [i | f | g | o] (PyTorch order).
    # i,f share one full 128-lane group -> single sigmoid push covers both.
    def lstm_gates(gates, cprev):
        sif = jax.nn.sigmoid(gates[:, :2 * H])
        i, f = sif[:, :H], sif[:, H:]
        g = jnp.tanh(gates[:, 2 * H:3 * H])
        o = jax.nn.sigmoid(gates[:, 3 * H:])
        c_new = f * cprev + i * g
        return o * jnp.tanh(c_new), c_new

    def lstm_gates_zero_state(gates):
        # c_prev == 0  ->  c_new = i * g  (drop the f * c_prev multiply entirely)
        sif = jax.nn.sigmoid(gates[:, :2 * H])
        i = sif[:, :H]
        g = jnp.tanh(gates[:, 2 * H:3 * H])
        o = jax.nn.sigmoid(gates[:, 3 * H:])
        c_new = i * g
        return o * jnp.tanh(c_new), c_new

    # --- step 0: zero initial states -> whh terms vanish; biases pre-summed (bih+bhh) ---
    g0 = jnp.dot(z.astype(bf16), w0xf_ref[...], preferred_element_type=f32) + b0f_ref[...]
    h0, c0 = lstm_gates_zero_state(g0)
    g1 = jnp.dot(h0.astype(bf16), w1x_ref[...], preferred_element_type=f32) + b1_ref[...]
    h1, c1 = lstm_gates_zero_state(g1)
    # TODO(synk): nn.LSTM inter-layer dropout (p=0.01) is a train-time op; omitted (inference).

    n_rec = n - 1
    if n_rec > 0:
        # Hoist bias broadcasts out of the recurrence (JAX does not CSE broadcast_in_dim).
        b0r_b = jnp.broadcast_to(b0r_ref[...], (B, 4 * H))
        b1_b = jnp.broadcast_to(b1_ref[...], (B, 4 * H))

        # steps 1..n-1: output head folded into layer-0 input weights (w0xr = wfc @ wih0),
        # so each step is two serial fused gate-matmul groups; gate inputs are two
        # accumulated dots (no lane concatenation on the critical path).
        def rec_step(_, carry):
            h0p, c0p, h1p, c1p = carry
            g0r = (jnp.dot(h1p.astype(bf16), w0xr_ref[...], preferred_element_type=f32)
                   + jnp.dot(h0p.astype(bf16), w0h_ref[...], preferred_element_type=f32)
                   + b0r_b)
            h0n, c0n = lstm_gates(g0r, c0p)
            g1r = (jnp.dot(h0n.astype(bf16), w1x_ref[...], preferred_element_type=f32)
                   + jnp.dot(h1p.astype(bf16), w1h_ref[...], preferred_element_type=f32)
                   + b1_b)
            h1n, c1n = lstm_gates(g1r, c1p)
            return h0n, c0n, h1n, c1n

        unroll = True if n_rec <= 8 else 2   # full unroll small n; small unroll large n
        h0, c0, h1, c1 = jax.lax.fori_loop(
            0, n_rec, rec_step, (h0, c0, h1, c1), unroll=unroll)

    # Real output head applied once, for the value fed to the decoder.
    y = jnp.dot(h1.astype(bf16), wfc_ref[...], preferred_element_type=f32) + bfc_ref[...]

    # --- AE decoder: Linear(latent, 64) -> ReLU -> Linear(64, C*F) ---
    h_dec = jnp.maximum(
        jnp.dot(y.astype(bf16), wd1_ref[...], preferred_element_type=f32) + bd1_ref[...], 0.0)
    out_ref[...] = jnp.dot(h_dec.astype(bf16), wd2_ref[...],
                           preferred_element_type=f32) + bd2_ref[...]


# -----------------------------------------------------------------------------
# Parameters (stand-in for normal_init), stored pre-transposed (in, out)
# -----------------------------------------------------------------------------
_PARAM_ORDER = ("we1", "be1", "we2", "be2",
                "wih0", "whh0", "bih0", "bhh0",
                "wih1", "whh1", "bih1", "bhh1",
                "wfc", "bfc", "wd1", "bd1", "wd2", "bd2")


def make_led_params(key, in_channels, feature_dim, latent_dim=2, hidden_dim=64):
    D = in_channels * feature_dim
    keys = jax.random.split(key, len(_PARAM_ORDER))

    def init(k, shape):
        return (0.05 * jax.random.normal(k, shape)).astype(jnp.float32)

    shapes = {
        "we1": (D, 64), "be1": (1, 64),
        "we2": (64, latent_dim), "be2": (1, latent_dim),
        "wih0": (latent_dim, 4 * hidden_dim), "whh0": (hidden_dim, 4 * hidden_dim),
        "bih0": (1, 4 * hidden_dim), "bhh0": (1, 4 * hidden_dim),
        "wih1": (hidden_dim, 4 * hidden_dim), "whh1": (hidden_dim, 4 * hidden_dim),
        "bih1": (1, 4 * hidden_dim), "bhh1": (1, 4 * hidden_dim),
        "wfc": (hidden_dim, latent_dim), "bfc": (1, latent_dim),
        "wd1": (latent_dim, 64), "bd1": (1, 64),
        "wd2": (64, D), "bd2": (1, D),
    }
    return {name: init(k, shapes[name]) for name, k in zip(_PARAM_ORDER, keys)}


def _prepare_kernel_params(params):
    """Wrapper-side weight prep: bias pre-sum, wfc folding, bf16 matmul operands."""
    f32, bf16 = jnp.float32, jnp.bfloat16
    wih0, whh0 = params["wih0"], params["whh0"]
    wfc, bfc = params["wfc"], params["bfc"]
    return dict(
        we1=params["we1"].astype(bf16), be1=params["be1"].astype(f32),
        we2=params["we2"].astype(bf16), be2=params["be2"].astype(f32),
        w0xf=wih0.astype(bf16),                                          # (L, 4H)
        b0f=(params["bih0"] + params["bhh0"]).astype(f32),               # (1, 4H)
        w0xr=(wfc @ wih0).astype(bf16),                                  # (H, 4H) wfc folded
        w0h=whh0.astype(bf16),                                           # (H, 4H)
        b0r=(bfc @ wih0 + params["bih0"] + params["bhh0"]).astype(f32),  # (1, 4H)
        w1x=params["wih1"].astype(bf16),                                 # (H, 4H)
        w1h=params["whh1"].astype(bf16),                                 # (H, 4H)
        b1=(params["bih1"] + params["bhh1"]).astype(f32),                # (1, 4H)
        wfc=wfc.astype(bf16), bfc=bfc.astype(f32),
        wd1=params["wd1"].astype(bf16), bd1=params["bd1"].astype(f32),
        wd2=params["wd2"].astype(bf16), bd2=params["bd2"].astype(f32),
    )


def _choose_batch_block(B):
    """B >= 16: split into >= 2 grid steps (v7x megacore); cap block at 512 rows."""
    if B < 16:
        return B
    half = (B + 1) // 2
    half = ((half + 7) // 8) * 8     # sublane alignment
    return min(half, 512)


# -----------------------------------------------------------------------------
# Wrapper
# -----------------------------------------------------------------------------
def led_forward(x, params, n=1, hidden_dim=64):
    """x: (B, in_channels, feature_dim) or (B, 1, in_channels, feature_dim)."""
    assert n >= 1
    B = x.shape[0]
    C, F = x.shape[-2], x.shape[-1]
    D = C * F
    L = params["we2"].shape[1]
    H = hidden_dim
    x_flat = jnp.reshape(x, (B, D)).astype(jnp.float32)        # nn.Flatten(start_dim=1)

    kp = _prepare_kernel_params(params)

    b_blk = _choose_batch_block(B)
    n_blocks = pl.cdiv(B, b_blk)
    B_pad = n_blocks * b_blk
    if B_pad != B:
        x_flat = jnp.pad(x_flat, ((0, B_pad - B), (0, 0)))      # padded rows are discarded

    weight_names = ("we1", "be1", "we2", "be2",
                    "w0xf", "b0f", "w0xr", "w0h", "b0r",
                    "w1x", "w1h", "b1",
                    "wfc", "bfc", "wd1", "bd1", "wd2", "bd2")
    weight_args = [kp[name] for name in weight_names]
    args = [x_flat] + weight_args

    def _full_spec(a):
        nd = a.ndim
        return pl.BlockSpec(a.shape, lambda i, _nd=nd: (0,) * _nd)   # constant index_map

    in_specs = ([pl.BlockSpec((b_blk, D), lambda i: (i, 0))]
                + [_full_spec(a) for a in weight_args])
    out_specs = pl.BlockSpec((b_blk, D), lambda i: (i, 0))

    # Advisory cost estimate for XLA's scheduler.
    enc_flops = 2 * B * (D * 64 + 64 * L)
    step0_flops = 2 * B * 4 * H * (L + H)
    rec_flops = (n - 1) * 2 * B * 4 * H * (4 * H)
    head_dec_flops = 2 * B * (H * L + L * 64 + 64 * D)
    bytes_accessed = sum(int(a.size) * a.dtype.itemsize for a in args) + B_pad * D * 4
    cost = pl.CostEstimate(
        flops=int(enc_flops + step0_flops + rec_flops + head_dec_flops),
        transcendentals=int(n * 2 * 5 * B * H),
        bytes_accessed=int(bytes_accessed))

    out = pl.pallas_call(
        functools.partial(led_forward_kernel, n, H),
        grid=(n_blocks,),
        in_specs=in_specs,
        out_specs=out_specs,
        out_shape=jax.ShapeDtypeStruct((B_pad, D), jnp.float32),
        compiler_params=pltpu.CompilerParams(dimension_semantics=("parallel",)),
        cost_estimate=cost,
    )(*args)

    if B_pad != B:
        out = out[:B]
    # nn.Unflatten(-1, (1, in_channels, feature_dim))
    return out.reshape(B, 1, C, F)


# -----------------------------------------------------------------------------
# Pure-JAX reference (mirrors the PyTorch module exactly: f32, no folding)
# -----------------------------------------------------------------------------
def led_reference(x, params, n=1, hidden_dim=64):
    B = x.shape[0]
    C, F = x.shape[-2], x.shape[-1]
    H = hidden_dim
    xf = jnp.reshape(x, (B, C * F)).astype(jnp.float32)

    h_enc = jnp.maximum(xf @ params["we1"] + params["be1"], 0.0)
    z = h_enc @ params["we2"] + params["be2"]

    def cell(inp, hp, cp, wih, whh, bih, bhh):
        g = inp @ wih + bih + hp @ whh + bhh
        i = jax.nn.sigmoid(g[:, 0 * H:1 * H])
        f = jax.nn.sigmoid(g[:, 1 * H:2 * H])
        gg = jnp.tanh(g[:, 2 * H:3 * H])
        o = jax.nn.sigmoid(g[:, 3 * H:4 * H])
        c = f * cp + i * gg
        return o * jnp.tanh(c), c

    h0 = c0 = h1 = c1 = jnp.zeros((B, H), jnp.float32)
    y = z
    for step in range(n):
        inp = z if step == 0 else y
        h0, c0 = cell(inp, h0, c0, params["wih0"], params["whh0"], params["bih0"], params["bhh0"])
        h1, c1 = cell(h0, h1, c1, params["wih1"], params["whh1"], params["bih1"], params["bhh1"])
        y = h1 @ params["wfc"] + params["bfc"]

    h_dec = jnp.maximum(y @ params["wd1"] + params["bd1"], 0.0)
    out = h_dec @ params["wd2"] + params["bd2"]
    return out.reshape(B, 1, C, F)


if __name__ == "__main__":
    in_channels = 2
    feature_dim = 16
    latent_dim = 2
    hidden_dim = 64

    key = jax.random.PRNGKey(0)
    k_param, k_x1, k_x2 = jax.random.split(key, 3)
    params = make_led_params(k_param, in_channels, feature_dim, latent_dim, hidden_dim)

    # Case 1: small batch (single block, fully unrolled recurrence), n=3.
    x1 = jax.random.normal(k_x1, (8, in_channels, feature_dim), dtype=jnp.float32)
    y1 = led_forward(x1, params, n=3, hidden_dim=hidden_dim)
    jax.block_until_ready(y1)
    assert y1.shape == (8, 1, in_channels, feature_dim), y1.shape
    assert y1.dtype == jnp.float32
    # bf16 matmul operands + wfc-folding reassociation -> tolerance-check vs f32 reference.
    r1 = led_reference(x1, params, n=3, hidden_dim=hidden_dim)
    err1 = float(jnp.max(jnp.abs(y1 - r1)))
    assert jnp.allclose(y1, r1, rtol=1e-2, atol=1e-2), err1

    # Case 2: multi-block grid with padding (B=24 -> 2 blocks of 16) and the
    # partially-unrolled fori_loop path (n=12).
    x2 = jax.random.normal(k_x2, (24, in_channels, feature_dim), dtype=jnp.float32)
    y2 = led_forward(x2, params, n=12, hidden_dim=hidden_dim)
    jax.block_until_ready(y2)
    assert y2.shape == (24, 1, in_channels, feature_dim), y2.shape
    r2 = led_reference(x2, params, n=12, hidden_dim=hidden_dim)
    err2 = float(jnp.max(jnp.abs(y2 - r2)))
    assert jnp.allclose(y2, r2, rtol=1e-2, atol=1e-2), err2

    print("KERNEL_OK")
</pallas_src>

<mosaic_0001>
module attributes {stable_mosaic.version = 11 : i64} {
  func.func @led_forward_kernel(%arg0: i32, %arg1: memref<8x32xf32, #tpu.memory_space<vmem>>, %arg2: memref<32x64xbf16, #tpu.memory_space<vmem>>, %arg3: memref<1x64xf32, #tpu.memory_space<vmem>>, %arg4: memref<64x2xbf16, #tpu.memory_space<vmem>>, %arg5: memref<1x2xf32, #tpu.memory_space<vmem>>, %arg6: memref<2x256xbf16, #tpu.memory_space<vmem>>, %arg7: memref<1x256xf32, #tpu.memory_space<vmem>>, %arg8: memref<64x256xbf16, #tpu.memory_space<vmem>>, %arg9: memref<64x256xbf16, #tpu.memory_space<vmem>>, %arg10: memref<1x256xf32, #tpu.memory_space<vmem>>, %arg11: memref<64x256xbf16, #tpu.memory_space<vmem>>, %arg12: memref<64x256xbf16, #tpu.memory_space<vmem>>, %arg13: memref<1x256xf32, #tpu.memory_space<vmem>>, %arg14: memref<64x2xbf16, #tpu.memory_space<vmem>>, %arg15: memref<1x2xf32, #tpu.memory_space<vmem>>, %arg16: memref<2x64xbf16, #tpu.memory_space<vmem>>, %arg17: memref<1x64xf32, #tpu.memory_space<vmem>>, %arg18: memref<64x32xbf16, #tpu.memory_space<vmem>>, %arg19: memref<1x32xf32, #tpu.memory_space<vmem>>, %arg20: memref<8x32xf32, #tpu.memory_space<vmem>>) attributes {dimension_semantics = [#tpu.dimension_semantics<parallel>], iteration_bounds = array<i64: 1>, scalar_prefetch = 0 : i64, scratch_operands = 0 : i64, tpu.core_type = #tpu.core_type<tc>, window_params = [{transform_indices = @transform_0, window_bounds = array<i64: 8, 32>}, {pipeline_mode = #tpu.pipeline_mode<synchronous>, transform_indices = @transform_1, window_bounds = array<i64: 32, 64>}, {pipeline_mode = #tpu.pipeline_mode<synchronous>, transform_indices = @transform_2, window_bounds = array<i64: 1, 64>}, {pipeline_mode = #tpu.pipeline_mode<synchronous>, transform_indices = @transform_3, window_bounds = array<i64: 64, 2>}, {pipeline_mode = #tpu.pipeline_mode<synchronous>, transform_indices = @transform_4, window_bounds = array<i64: 1, 2>}, {pipeline_mode = #tpu.pipeline_mode<synchronous>, transform_indices = @transform_5, window_bounds = array<i64: 2, 256>}, {pipeline_mode = #tpu.pipeline_mode<synchronous>, transform_indices = @transform_6, window_bounds = array<i64: 1, 256>}, {pipeline_mode = #tpu.pipeline_mode<synchronous>, transform_indices = @transform_7, window_bounds = array<i64: 64, 256>}, {pipeline_mode = #tpu.pipeline_mode<synchronous>, transform_indices = @transform_8, window_bounds = array<i64: 64, 256>}, {pipeline_mode = #tpu.pipeline_mode<synchronous>, transform_indices = @transform_9, window_bounds = array<i64: 1, 256>}, {pipeline_mode = #tpu.pipeline_mode<synchronous>, transform_indices = @transform_10, window_bounds = array<i64: 64, 256>}, {pipeline_mode = #tpu.pipeline_mode<synchronous>, transform_indices = @transform_11, window_bounds = array<i64: 64, 256>}, {pipeline_mode = #tpu.pipeline_mode<synchronous>, transform_indices = @transform_12, window_bounds = array<i64: 1, 256>}, {pipeline_mode = #tpu.pipeline_mode<synchronous>, transform_indices = @transform_13, window_bounds = array<i64: 64, 2>}, {pipeline_mode = #tpu.pipeline_mode<synchronous>, transform_indices = @transform_14, window_bounds = array<i64: 1, 2>}, {pipeline_mode = #tpu.pipeline_mode<synchronous>, transform_indices = @transform_15, window_bounds = array<i64: 2, 64>}, {pipeline_mode = #tpu.pipeline_mode<synchronous>, transform_indices = @transform_16, window_bounds = array<i64: 1, 64>}, {pipeline_mode = #tpu.pipeline_mode<synchronous>, transform_indices = @transform_17, window_bounds = array<i64: 64, 32>}, {pipeline_mode = #tpu.pipeline_mode<synchronous>, transform_indices = @transform_18, window_bounds = array<i64: 1, 32>}, {transform_indices = @transform_19, window_bounds = array<i64: 8, 32>}]} {
    %c0 = arith.constant 0 : index
    %c0_0 = arith.constant 0 : index
    %0 = vector.load %arg1[%c0, %c0_0] : memref<8x32xf32, #tpu.memory_space<vmem>>, vector<8x32xf32>
    %1 = arith.truncf %0 : vector<8x32xf32> to vector<8x32xbf16>
    %c0_1 = arith.constant 0 : index
    %c0_2 = arith.constant 0 : index
    %2 = vector.load %arg2[%c0_1, %c0_2] : memref<32x64xbf16, #tpu.memory_space<vmem>>, vector<32x64xbf16>
    %cst = arith.constant dense<0.000000e+00> : vector<8x64xf32>
    %3 = tpu.matmul %1, %2, %cst {dimension_numbers = #tpu.dot_dimension_numbers<[1], [0], [0], [1], [0, 0, 1, 1], [], []>} : vector<8x32xbf16>, vector<32x64xbf16>, vector<8x64xf32> -> vector<8x64xf32>
    %c0_3 = arith.constant 0 : index
    %c0_4 = arith.constant 0 : index
    %4 = vector.load %arg3[%c0_3, %c0_4] : memref<1x64xf32, #tpu.memory_space<vmem>>, vector<1x64xf32>
    %5 = vector.broadcast %4 : vector<1x64xf32> to vector<8x64xf32>
    %6 = arith.addf %3, %5 : vector<8x64xf32>
    %cst_5 = arith.constant 0.000000e+00 : f32
    %7 = vector.broadcast %cst_5 : f32 to vector<8x64xf32>
    %8 = arith.maximumf %6, %7 : vector<8x64xf32>
    %9 = arith.truncf %8 : vector<8x64xf32> to vector<8x64xbf16>
    %c0_6 = arith.constant 0 : index
    %c0_7 = arith.constant 0 : index
    %10 = vector.load %arg4[%c0_6, %c0_7] : memref<64x2xbf16, #tpu.memory_space<vmem>>, vector<64x2xbf16>
    %cst_8 = arith.constant dense<0.000000e+00> : vector<8x2xf32>
    %11 = tpu.matmul %9, %10, %cst_8 {dimension_numbers = #tpu.dot_dimension_numbers<[1], [0], [0], [1], [0, 0, 1, 1], [], []>} : vector<8x64xbf16>, vector<64x2xbf16>, vector<8x2xf32> -> vector<8x2xf32>
    %c0_9 = arith.constant 0 : index
    %c0_10 = arith.constant 0 : index
    %12 = vector.load %arg5[%c0_9, %c0_10] : memref<1x2xf32, #tpu.memory_space<vmem>>, vector<1x2xf32>
    %13 = vector.broadcast %12 : vector<1x2xf32> to vector<8x2xf32>
    %14 = arith.addf %11, %13 : vector<8x2xf32>
    %15 = arith.truncf %14 : vector<8x2xf32> to vector<8x2xbf16>
    %c0_11 = arith.constant 0 : index
    %c0_12 = arith.constant 0 : index
    %16 = vector.load %arg6[%c0_11, %c0_12] : memref<2x256xbf16, #tpu.memory_space<vmem>>, vector<2x256xbf16>
    %cst_13 = arith.constant dense<0.000000e+00> : vector<8x256xf32>
    %17 = tpu.matmul %15, %16, %cst_13 {dimension_numbers = #tpu.dot_dimension_numbers<[1], [0], [0], [1], [0, 0, 1, 1], [], []>} : vector<8x2xbf16>, vector<2x256xbf16>, vector<8x256xf32> -> vector<8x256xf32>
    %c0_14 = arith.constant 0 : index
    %c0_15 = arith.constant 0 : index
    %18 = vector.load %arg7[%c0_14, %c0_15] : memref<1x256xf32, #tpu.memory_space<vmem>>, vector<1x256xf32>
    %19 = vector.broadcast %18 : vector<1x256xf32> to vector<8x256xf32>
    %20 = arith.addf %17, %19 : vector<8x256xf32>
    %21 = vector.extract_strided_slice %20 {offsets = [0, 0], sizes = [8, 128], strides = [1, 1]} : vector<8x256xf32> to vector<8x128xf32>
    %22 = arith.negf %21 : vector<8x128xf32>
    %23 = math.exp %22 : vector<8x128xf32>
    %cst_16 = arith.constant 1.000000e+00 : f32
    %24 = vector.broadcast %cst_16 : f32 to vector<8x128xf32>
    %25 = arith.addf %24, %23 : vector<8x128xf32>
    %26 = arith.divf %24, %25 : vector<8x128xf32>
    %27 = vector.extract_strided_slice %26 {offsets = [0, 0], sizes = [8, 64], strides = [1, 1]} : vector<8x128xf32> to vector<8x64xf32>
    %28 = vector.extract_strided_slice %20 {offsets = [0, 128], sizes = [8, 64], strides = [1, 1]} : vector<8x256xf32> to vector<8x64xf32>
    %29 = math.tanh %28 : vector<8x64xf32>
    %30 = vector.extract_strided_slice %20 {offsets = [0, 192], sizes = [8, 64], strides = [1, 1]} : vector<8x256xf32> to vector<8x64xf32>
    %31 = arith.negf %30 : vector<8x64xf32>
    %32 = math.exp %31 : vector<8x64xf32>
    %cst_17 = arith.constant 1.000000e+00 : f32
    %33 = vector.broadcast %cst_17 : f32 to vector<8x64xf32>
    %34 = arith.addf %33, %32 : vector<8x64xf32>
    %35 = arith.divf %33, %34 : vector<8x64xf32>
    %36 = arith.mulf %27, %29 : vector<8x64xf32>
    %37 = math.tanh %36 : vector<8x64xf32>
    %38 = arith.mulf %35, %37 : vector<8x64xf32>
    %39 = arith.truncf %38 : vector<8x64xf32> to vector<8x64xbf16>
    %c0_18 = arith.constant 0 : index
    %c0_19 = arith.constant 0 : index
    %40 = vector.load %arg11[%c0_18, %c0_19] : memref<64x256xbf16, #tpu.memory_space<vmem>>, vector<64x256xbf16>
    %cst_20 = arith.constant dense<0.000000e+00> : vector<8x256xf32>
    %41 = tpu.matmul %39, %40, %cst_20 {dimension_numbers = #tpu.dot_dimension_numbers<[1], [0], [0], [1], [0, 0, 1, 1], [], []>} : vector<8x64xbf16>, vector<64x256xbf16>, vector<8x256xf32> -> vector<8x256xf32>
    %c0_21 = arith.constant 0 : index
    %c0_22 = arith.constant 0 : index
    %42 = vector.load %arg13[%c0_21, %c0_22] : memref<1x256xf32, #tpu.memory_space<vmem>>, vector<1x256xf32>
    %43 = vector.broadcast %42 : vector<1x256xf32> to vector<8x256xf32>
    %44 = arith.addf %41, %43 : vector<8x256xf32>
    %45 = vector.extract_strided_slice %44 {offsets = [0, 0], sizes = [8, 128], strides = [1, 1]} : vector<8x256xf32> to vector<8x128xf32>
    %46 = arith.negf %45 : vector<8x128xf32>
    %47 = math.exp %46 : vector<8x128xf32>
    %cst_23 = arith.constant 1.000000e+00 : f32
    %48 = vector.broadcast %cst_23 : f32 to vector<8x128xf32>
    %49 = arith.addf %48, %47 : vector<8x128xf32>
    %50 = arith.divf %48, %49 : vector<8x128xf32>
    %51 = vector.extract_strided_slice %50 {offsets = [0, 0], sizes = [8, 64], strides = [1, 1]} : vector<8x128xf32> to vector<8x64xf32>
    %52 = vector.extract_strided_slice %44 {offsets = [0, 128], sizes = [8, 64], strides = [1, 1]} : vector<8x256xf32> to vector<8x64xf32>
    %53 = math.tanh %52 : vector<8x64xf32>
    %54 = vector.extract_strided_slice %44 {offsets = [0, 192], sizes = [8, 64], strides = [1, 1]} : vector<8x256xf32> to vector<8x64xf32>
    %55 = arith.negf %54 : vector<8x64xf32>
    %56 = math.exp %55 : vector<8x64xf32>
    %cst_24 = arith.constant 1.000000e+00 : f32
    %57 = vector.broadcast %cst_24 : f32 to vector<8x64xf32>
    %58 = arith.addf %57, %56 : vector<8x64xf32>
    %59 = arith.divf %57, %58 : vector<8x64xf32>
    %60 = arith.mulf %51, %53 : vector<8x64xf32>
    %61 = math.tanh %60 : vector<8x64xf32>
    %62 = arith.mulf %59, %61 : vector<8x64xf32>
    %c0_25 = arith.constant 0 : index
    %c0_26 = arith.constant 0 : index
    %63 = vector.load %arg10[%c0_25, %c0_26] : memref<1x256xf32, #tpu.memory_space<vmem>>, vector<1x256xf32>
    %64 = vector.shape_cast %63 : vector<1x256xf32> to vector<1x256xf32>
    %65 = vector.broadcast %64 : vector<1x256xf32> to vector<8x256xf32>
    %c0_27 = arith.constant 0 : index
    %c0_28 = arith.constant 0 : index
    %66 = vector.load %arg13[%c0_27, %c0_28] : memref<1x256xf32, #tpu.memory_space<vmem>>, vector<1x256xf32>
    %67 = vector.shape_cast %66 : vector<1x256xf32> to vector<1x256xf32>
    %68 = vector.broadcast %67 : vector<1x256xf32> to vector<8x256xf32>
    %c0_i32 = arith.constant 0 : i32
    %69 = arith.truncf %62 : vector<8x64xf32> to vector<8x64xbf16>
    %c0_29 = arith.constant 0 : index
    %c0_30 = arith.constant 0 : index
    %70 = vector.load %arg8[%c0_29, %c0_30] : memref<64x256xbf16, #tpu.memory_space<vmem>>, vector<64x256xbf16>
    %cst_31 = arith.constant dense<0.000000e+00> : vector<8x256xf32>
    %71 = tpu.matmul %69, %70, %cst_31 {dimension_numbers = #tpu.dot_dimension_numbers<[1], [0], [0], [1], [0, 0, 1, 1], [], []>} : vector<8x64xbf16>, vector<64x256xbf16>, vector<8x256xf32> -> vector<8x256xf32>
    %72 = arith.truncf %38 : vector<8x64xf32> to vector<8x64xbf16>
    %c0_32 = arith.constant 0 : index
    %c0_33 = arith.constant 0 : index
    %73 = vector.load %arg9[%c0_32, %c0_33] : memref<64x256xbf16, #tpu.memory_space<vmem>>, vector<64x256xbf16>
    %cst_34 = arith.constant dense<0.000000e+00> : vector<8x256xf32>
    %74 = tpu.matmul %72, %73, %cst_34 {dimension_numbers = #tpu.dot_dimension_numbers<[1], [0], [0], [1], [0, 0, 1, 1], [], []>} : vector<8x64xbf16>, vector<64x256xbf16>, vector<8x256xf32> -> vector<8x256xf32>
    %75 = arith.addf %71, %74 : vector<8x256xf32>
    %76 = arith.addf %75, %65 : vector<8x256xf32>
    %77 = vector.extract_strided_slice %76 {offsets = [0, 0], sizes = [8, 128], strides = [1, 1]} : vector<8x256xf32> to vector<8x128xf32>
    %78 = arith.negf %77 : vector<8x128xf32>
    %79 = math.exp %78 : vector<8x128xf32>
    %cst_35 = arith.constant 1.000000e+00 : f32
    %80 = vector.broadcast %cst_35 : f32 to vector<8x128xf32>
    %81 = arith.addf %80, %79 : vector<8x128xf32>
    %82 = arith.divf %80, %81 : vector<8x128xf32>
    %83 = vector.extract_strided_slice %82 {offsets = [0, 0], sizes = [8, 64], strides = [1, 1]} : vector<8x128xf32> to vector<8x64xf32>
    %84 = vector.extract_strided_slice %82 {offsets = [0, 64], sizes = [8, 64], strides = [1, 1]} : vector<8x128xf32> to vector<8x64xf32>
    %85 = vector.extract_strided_slice %76 {offsets = [0, 128], sizes = [8, 64], strides = [1, 1]} : vector<8x256xf32> to vector<8x64xf32>
    %86 = math.tanh %85 : vector<8x64xf32>
    %87 = vector.extract_strided_slice %76 {offsets = [0, 192], sizes = [8, 64], strides = [1, 1]} : vector<8x256xf32> to vector<8x64xf32>
    %88 = arith.negf %87 : vector<8x64xf32>
    %89 = math.exp %88 : vector<8x64xf32>
    %cst_36 = arith.constant 1.000000e+00 : f32
    %90 = vector.broadcast %cst_36 : f32 to vector<8x64xf32>
    %91 = arith.addf %90, %89 : vector<8x64xf32>
    %92 = arith.divf %90, %91 : vector<8x64xf32>
    %93 = arith.mulf %84, %36 : vector<8x64xf32>
    %94 = arith.mulf %83, %86 : vector<8x64xf32>
    %95 = arith.addf %93, %94 : vector<8x64xf32>
    %96 = math.tanh %95 : vector<8x64xf32>
    %97 = arith.mulf %92, %96 : vector<8x64xf32>
    %98 = arith.truncf %97 : vector<8x64xf32> to vector<8x64xbf16>
    %c0_37 = arith.constant 0 : index
    %c0_38 = arith.constant 0 : index
    %99 = vector.load %arg11[%c0_37, %c0_38] : memref<64x256xbf16, #tpu.memory_space<vmem>>, vector<64x256xbf16>
    %cst_39 = arith.constant dense<0.000000e+00> : vector<8x256xf32>
    %100 = tpu.matmul %98, %99, %cst_39 {dimension_numbers = #tpu.dot_dimension_numbers<[1], [0], [0], [1], [0, 0, 1, 1], [], []>} : vector<8x64xbf16>, vector<64x256xbf16>, vector<8x256xf32> -> vector<8x256xf32>
    %101 = arith.truncf %62 : vector<8x64xf32> to vector<8x64xbf16>
    %c0_40 = arith.constant 0 : index
    %c0_41 = arith.constant 0 : index
    %102 = vector.load %arg12[%c0_40, %c0_41] : memref<64x256xbf16, #tpu.memory_space<vmem>>, vector<64x256xbf16>
    %cst_42 = arith.constant dense<0.000000e+00> : vector<8x256xf32>
    %103 = tpu.matmul %101, %102, %cst_42 {dimension_numbers = #tpu.dot_dimension_numbers<[1], [0], [0], [1], [0, 0, 1, 1], [], []>} : vector<8x64xbf16>, vector<64x256xbf16>, vector<8x256xf32> -> vector<8x256xf32>
    %104 = arith.addf %100, %103 : vector<8x256xf32>
    %105 = arith.addf %104, %68 : vector<8x256xf32>
    %106 = vector.extract_strided_slice %105 {offsets = [0, 0], sizes = [8, 128], strides = [1, 1]} : vector<8x256xf32> to vector<8x128xf32>
    %107 = arith.negf %106 : vector<8x128xf32>
    %108 = math.exp %107 : vector<8x128xf32>
    %cst_43 = arith.constant 1.000000e+00 : f32
    %109 = vector.broadcast %cst_43 : f32 to vector<8x128xf32>
    %110 = arith.addf %109, %108 : vector<8x128xf32>
    %111 = arith.divf %109, %110 : vector<8x128xf32>
    %112 = vector.extract_strided_slice %111 {offsets = [0, 0], sizes = [8, 64], strides = [1, 1]} : vector<8x128xf32> to vector<8x64xf32>
    %113 = vector.extract_strided_slice %111 {offsets = [0, 64], sizes = [8, 64], strides = [1, 1]} : vector<8x128xf32> to vector<8x64xf32>
    %114 = vector.extract_strided_slice %105 {offsets = [0, 128], sizes = [8, 64], strides = [1, 1]} : vector<8x256xf32> to vector<8x64xf32>
    %115 = math.tanh %114 : vector<8x64xf32>
    %116 = vector.extract_strided_slice %105 {offsets = [0, 192], sizes = [8, 64], strides = [1, 1]} : vector<8x256xf32> to vector<8x64xf32>
    %117 = arith.negf %116 : vector<8x64xf32>
    %118 = math.exp %117 : vector<8x64xf32>
    %cst_44 = arith.constant 1.000000e+00 : f32
    %119 = vector.broadcast %cst_44 : f32 to vector<8x64xf32>
    %120 = arith.addf %119, %118 : vector<8x64xf32>
    %121 = arith.divf %119, %120 : vector<8x64xf32>
    %122 = arith.mulf %113, %60 : vector<8x64xf32>
    %123 = arith.mulf %112, %115 : vector<8x64xf32>
    %124 = arith.addf %122, %123 : vector<8x64xf32>
    %125 = math.tanh %124 : vector<8x64xf32>
    %126 = arith.mulf %121, %125 : vector<8x64xf32>
    %c1_i32 = arith.constant 1 : i32
    %127 = arith.truncf %126 : vector<8x64xf32> to vector<8x64xbf16>
    %c0_45 = arith.constant 0 : index
    %c0_46 = arith.constant 0 : index
    %128 = vector.load %arg8[%c0_45, %c0_46] : memref<64x256xbf16, #tpu.memory_space<vmem>>, vector<64x256xbf16>
    %cst_47 = arith.constant dense<0.000000e+00> : vector<8x256xf32>
    %129 = tpu.matmul %127, %128, %cst_47 {dimension_numbers = #tpu.dot_dimension_numbers<[1], [0], [0], [1], [0, 0, 1, 1], [], []>} : vector<8x64xbf16>, vector<64x256xbf16>, vector<8x256xf32> -> vector<8x256xf32>
    %130 = arith.truncf %97 : vector<8x64xf32> to vector<8x64xbf16>
    %c0_48 = arith.constant 0 : index
    %c0_49 = arith.constant 0 : index
    %131 = vector.load %arg9[%c0_48, %c0_49] : memref<64x256xbf16, #tpu.memory_space<vmem>>, vector<64x256xbf16>
    %cst_50 = arith.constant dense<0.000000e+00> : vector<8x256xf32>
    %132 = tpu.matmul %130, %131, %cst_50 {dimension_numbers = #tpu.dot_dimension_numbers<[1], [0], [0], [1], [0, 0, 1, 1], [], []>} : vector<8x64xbf16>, vector<64x256xbf16>, vector<8x256xf32> -> vector<8x256xf32>
    %133 = arith.addf %129, %132 : vector<8x256xf32>
    %134 = arith.addf %133, %65 : vector<8x256xf32>
    %135 = vector.extract_strided_slice %134 {offsets = [0, 0], sizes = [8, 128], strides = [1, 1]} : vector<8x256xf32> to vector<8x128xf32>
    %136 = arith.negf %135 : vector<8x128xf32>
    %137 = math.exp %136 : vector<8x128xf32>
    %cst_51 = arith.constant 1.000000e+00 : f32
    %138 = vector.broadcast %cst_51 : f32 to vector<8x128xf32>
    %139 = arith.addf %138, %137 : vector<8x128xf32>
    %140 = arith.divf %138, %139 : vector<8x128xf32>
    %141 = vector.extract_strided_slice %140 {offsets = [0, 0], sizes = [8, 64], strides = [1, 1]} : vector<8x128xf32> to vector<8x64xf32>
    %142 = vector.extract_strided_slice %140 {offsets = [0, 64], sizes = [8, 64], strides = [1, 1]} : vector<8x128xf32> to vector<8x64xf32>
    %143 = vector.extract_strided_slice %134 {offsets = [0, 128], sizes = [8, 64], strides = [1, 1]} : vector<8x256xf32> to vector<8x64xf32>
    %144 = math.tanh %143 : vector<8x64xf32>
    %145 = vector.extract_strided_slice %134 {offsets = [0, 192], sizes = [8, 64], strides = [1, 1]} : vector<8x256xf32> to vector<8x64xf32>
    %146 = arith.negf %145 : vector<8x64xf32>
    %147 = math.exp %146 : vector<8x64xf32>
    %cst_52 = arith.constant 1.000000e+00 : f32
    %148 = vector.broadcast %cst_52 : f32 to vector<8x64xf32>
    %149 = arith.addf %148, %147 : vector<8x64xf32>
    %150 = arith.divf %148, %149 : vector<8x64xf32>
    %151 = arith.mulf %142, %95 : vector<8x64xf32>
    %152 = arith.mulf %141, %144 : vector<8x64xf32>
    %153 = arith.addf %151, %152 : vector<8x64xf32>
    %154 = math.tanh %153 : vector<8x64xf32>
    %155 = arith.mulf %150, %154 : vector<8x64xf32>
    %156 = arith.truncf %155 : vector<8x64xf32> to vector<8x64xbf16>
    %c0_53 = arith.constant 0 : index
    %c0_54 = arith.constant 0 : index
    %157 = vector.load %arg11[%c0_53, %c0_54] : memref<64x256xbf16, #tpu.memory_space<vmem>>, vector<64x256xbf16>
    %cst_55 = arith.constant dense<0.000000e+00> : vector<8x256xf32>
    %158 = tpu.matmul %156, %157, %cst_55 {dimension_numbers = #tpu.dot_dimension_numbers<[1], [0], [0], [1], [0, 0, 1, 1], [], []>} : vector<8x64xbf16>, vector<64x256xbf16>, vector<8x256xf32> -> vector<8x256xf32>
    %159 = arith.truncf %126 : vector<8x64xf32> to vector<8x64xbf16>
    %c0_56 = arith.constant 0 : index
    %c0_57 = arith.constant 0 : index
    %160 = vector.load %arg12[%c0_56, %c0_57] : memref<64x256xbf16, #tpu.memory_space<vmem>>, vector<64x256xbf16>
    %cst_58 = arith.constant dense<0.000000e+00> : vector<8x256xf32>
    %161 = tpu.matmul %159, %160, %cst_58 {dimension_numbers = #tpu.dot_dimension_numbers<[1], [0], [0], [1], [0, 0, 1, 1], [], []>} : vector<8x64xbf16>, vector<64x256xbf16>, vector<8x256xf32> -> vector<8x256xf32>
    %162 = arith.addf %158, %161 : vector<8x256xf32>
    %163 = arith.addf %162, %68 : vector<8x256xf32>
    %164 = vector.extract_strided_slice %163 {offsets = [0, 0], sizes = [8, 128], strides = [1, 1]} : vector<8x256xf32> to vector<8x128xf32>
    %165 = arith.negf %164 : vector<8x128xf32>
    %166 = math.exp %165 : vector<8x128xf32>
    %cst_59 = arith.constant 1.000000e+00 : f32
    %167 = vector.broadcast %cst_59 : f32 to vector<8x128xf32>
    %168 = arith.addf %167, %166 : vector<8x128xf32>
    %169 = arith.divf %167, %168 : vector<8x128xf32>
    %170 = vector.extract_strided_slice %169 {offsets = [0, 0], sizes = [8, 64], strides = [1, 1]} : vector<8x128xf32> to vector<8x64xf32>
    %171 = vector.extract_strided_slice %169 {offsets = [0, 64], sizes = [8, 64], strides = [1, 1]} : vector<8x128xf32> to vector<8x64xf32>
    %172 = vector.extract_strided_slice %163 {offsets = [0, 128], sizes = [8, 64], strides = [1, 1]} : vector<8x256xf32> to vector<8x64xf32>
    %173 = math.tanh %172 : vector<8x64xf32>
    %174 = vector.extract_strided_slice %163 {offsets = [0, 192], sizes = [8, 64], strides = [1, 1]} : vector<8x256xf32> to vector<8x64xf32>
    %175 = arith.negf %174 : vector<8x64xf32>
    %176 = math.exp %175 : vector<8x64xf32>
    %cst_60 = arith.constant 1.000000e+00 : f32
    %177 = vector.broadcast %cst_60 : f32 to vector<8x64xf32>
    %178 = arith.addf %177, %176 : vector<8x64xf32>
    %179 = arith.divf %177, %178 : vector<8x64xf32>
    %180 = arith.mulf %171, %124 : vector<8x64xf32>
    %181 = arith.mulf %170, %173 : vector<8x64xf32>
    %182 = arith.addf %180, %181 : vector<8x64xf32>
    %183 = math.tanh %182 : vector<8x64xf32>
    %184 = arith.mulf %179, %183 : vector<8x64xf32>
    %185 = arith.truncf %184 : vector<8x64xf32> to vector<8x64xbf16>
    %c0_61 = arith.constant 0 : index
    %c0_62 = arith.constant 0 : index
    %186 = vector.load %arg14[%c0_61, %c0_62] : memref<64x2xbf16, #tpu.memory_space<vmem>>, vector<64x2xbf16>
    %cst_63 = arith.constant dense<0.000000e+00> : vector<8x2xf32>
    %187 = tpu.matmul %185, %186, %cst_63 {dimension_numbers = #tpu.dot_dimension_numbers<[1], [0], [0], [1], [0, 0, 1, 1], [], []>} : vector<8x64xbf16>, vector<64x2xbf16>, vector<8x2xf32> -> vector<8x2xf32>
    %c0_64 = arith.constant 0 : index
    %c0_65 = arith.constant 0 : index
    %188 = vector.load %arg15[%c0_64, %c0_65] : memref<1x2xf32, #tpu.memory_space<vmem>>, vector<1x2xf32>
    %189 = vector.broadcast %188 : vector<1x2xf32> to vector<8x2xf32>
    %190 = arith.addf %187, %189 : vector<8x2xf32>
    %191 = arith.truncf %190 : vector<8x2xf32> to vector<8x2xbf16>
    %c0_66 = arith.constant 0 : index
    %c0_67 = arith.constant 0 : index
    %192 = vector.load %arg16[%c0_66, %c0_67] : memref<2x64xbf16, #tpu.memory_space<vmem>>, vector<2x64xbf16>
    %cst_68 = arith.constant dense<0.000000e+00> : vector<8x64xf32>
    %193 = tpu.matmul %191, %192, %cst_68 {dimension_numbers = #tpu.dot_dimension_numbers<[1], [0], [0], [1], [0, 0, 1, 1], [], []>} : vector<8x2xbf16>, vector<2x64xbf16>, vector<8x64xf32> -> vector<8x64xf32>
    %c0_69 = arith.constant 0 : index
    %c0_70 = arith.constant 0 : index
    %194 = vector.load %arg17[%c0_69, %c0_70] : memref<1x64xf32, #tpu.memory_space<vmem>>, vector<1x64xf32>
    %195 = vector.broadcast %194 : vector<1x64xf32> to vector<8x64xf32>
    %196 = arith.addf %193, %195 : vector<8x64xf32>
    %cst_71 = arith.constant 0.000000e+00 : f32
    %197 = vector.broadcast %cst_71 : f32 to vector<8x64xf32>
    %198 = arith.maximumf %196, %197 : vector<8x64xf32>
    %199 = arith.truncf %198 : vector<8x64xf32> to vector<8x64xbf16>
    %c0_72 = arith.constant 0 : index
    %c0_73 = arith.constant 0 : index
    %200 = vector.load %arg18[%c0_72, %c0_73] : memref<64x32xbf16, #tpu.memory_space<vmem>>, vector<64x32xbf16>
    %cst_74 = arith.constant dense<0.000000e+00> : vector<8x32xf32>
    %201 = tpu.matmul %199, %200, %cst_74 {dimension_numbers = #tpu.dot_dimension_numbers<[1], [0], [0], [1], [0, 0, 1, 1], [], []>} : vector<8x64xbf16>, vector<64x32xbf16>, vector<8x32xf32> -> vector<8x32xf32>
    %c0_75 = arith.constant 0 : index
    %c0_76 = arith.constant 0 : index
    %202 = vector.load %arg19[%c0_75, %c0_76] : memref<1x32xf32, #tpu.memory_space<vmem>>, vector<1x32xf32>
    %203 = vector.broadcast %202 : vector<1x32xf32> to vector<8x32xf32>
    %204 = arith.addf %201, %203 : vector<8x32xf32>
    %c0_77 = arith.constant 0 : index
    %c0_78 = arith.constant 0 : index
    %205 = vector.load %arg20[%c0_77, %c0_78] : memref<8x32xf32, #tpu.memory_space<vmem>>, vector<8x32xf32>
    tpu.vector_store %arg20[%c0_77, %c0_78], %204 {strides = array<i32>} : memref<8x32xf32, #tpu.memory_space<vmem>>, vector<8x32xf32>,
    return
  }
  func.func @transform_0(%arg0: i32) -> (i32, i32) {
    %c0_i32 = arith.constant 0 : i32
    %c0_i32_0 = arith.constant 0 : i32
    return %arg0, %c0_i32 : i32, i32
  }
  func.func @transform_1(%arg0: i32) -> (i32, i32) {
    %c0_i32 = arith.constant 0 : i32
    %c0_i32_0 = arith.constant 0 : i32
    %c0_i32_1 = arith.constant 0 : i32
    return %c0_i32, %c0_i32_0 : i32, i32
  }
  func.func @transform_2(%arg0: i32) -> (i32, i32) {
    %c0_i32 = arith.constant 0 : i32
    %c0_i32_0 = arith.constant 0 : i32
    %c0_i32_1 = arith.constant 0 : i32
    return %c0_i32, %c0_i32_0 : i32, i32
  }
  func.func @transform_3(%arg0: i32) -> (i32, i32) {
    %c0_i32 = arith.constant 0 : i32
    %c0_i32_0 = arith.constant 0 : i32
    %c0_i32_1 = arith.constant 0 : i32
    return %c0_i32, %c0_i32_0 : i32, i32
  }
  func.func @transform_4(%arg0: i32) -> (i32, i32) {
    %c0_i32 = arith.constant 0 : i32
    %c0_i32_0 = arith.constant 0 : i32
    %c0_i32_1 = arith.constant 0 : i32
    return %c0_i32, %c0_i32_0 : i32, i32
  }
  func.func @transform_5(%arg0: i32) -> (i32, i32) {
    %c0_i32 = arith.constant 0 : i32
    %c0_i32_0 = arith.constant 0 : i32
    %c0_i32_1 = arith.constant 0 : i32
    return %c0_i32, %c0_i32_0 : i32, i32
  }
  func.func @transform_6(%arg0: i32) -> (i32, i32) {
    %c0_i32 = arith.constant 0 : i32
    %c0_i32_0 = arith.constant 0 : i32
    %c0_i32_1 = arith.constant 0 : i32
    return %c0_i32, %c0_i32_0 : i32, i32
  }
  func.func @transform_7(%arg0: i32) -> (i32, i32) {
    %c0_i32 = arith.constant 0 : i32
    %c0_i32_0 = arith.constant 0 : i32
    %c0_i32_1 = arith.constant 0 : i32
    return %c0_i32, %c0_i32_0 : i32, i32
  }
  func.func @transform_8(%arg0: i32) -> (i32, i32) {
    %c0_i32 = arith.constant 0 : i32
    %c0_i32_0 = arith.constant 0 : i32
    %c0_i32_1 = arith.constant 0 : i32
    return %c0_i32, %c0_i32_0 : i32, i32
  }
  func.func @transform_9(%arg0: i32) -> (i32, i32) {
    %c0_i32 = arith.constant 0 : i32
    %c0_i32_0 = arith.constant 0 : i32
    %c0_i32_1 = arith.constant 0 : i32
    return %c0_i32, %c0_i32_0 : i32, i32
  }
  func.func @transform_10(%arg0: i32) -> (i32, i32) {
    %c0_i32 = arith.constant 0 : i32
    %c0_i32_0 = arith.constant 0 : i32
    %c0_i32_1 = arith.constant 0 : i32
    return %c0_i32, %c0_i32_0 : i32, i32
  }
  func.func @transform_11(%arg0: i32) -> (i32, i32) {
    %c0_i32 = arith.constant 0 : i32
    %c0_i32_0 = arith.constant 0 : i32
    %c0_i32_1 = arith.constant 0 : i32
    return %c0_i32, %c0_i32_0 : i32, i32
  }
  func.func @transform_12(%arg0: i32) -> (i32, i32) {
    %c0_i32 = arith.constant 0 : i32
    %c0_i32_0 = arith.constant 0 : i32
    %c0_i32_1 = arith.constant 0 : i32
    return %c0_i32, %c0_i32_0 : i32, i32
  }
  func.func @transform_13(%arg0: i32) -> (i32, i32) {
    %c0_i32 = arith.constant 0 : i32
    %c0_i32_0 = arith.constant 0 : i32
    %c0_i32_1 = arith.constant 0 : i32
    return %c0_i32, %c0_i32_0 : i32, i32
  }
  func.func @transform_14(%arg0: i32) -> (i32, i32) {
    %c0_i32 = arith.constant 0 : i32
    %c0_i32_0 = arith.constant 0 : i32
    %c0_i32_1 = arith.constant 0 : i32
    return %c0_i32, %c0_i32_0 : i32, i32
  }
  func.func @transform_15(%arg0: i32) -> (i32, i32) {
    %c0_i32 = arith.constant 0 : i32
    %c0_i32_0 = arith.constant 0 : i32
    %c0_i32_1 = arith.constant 0 : i32
    return %c0_i32, %c0_i32_0 : i32, i32
  }
  func.func @transform_16(%arg0: i32) -> (i32, i32) {
    %c0_i32 = arith.constant 0 : i32
    %c0_i32_0 = arith.constant 0 : i32
    %c0_i32_1 = arith.constant 0 : i32
    return %c0_i32, %c0_i32_0 : i32, i32
  }
  func.func @transform_17(%arg0: i32) -> (i32, i32) {
    %c0_i32 = arith.constant 0 : i32
    %c0_i32_0 = arith.constant 0 : i32
    %c0_i32_1 = arith.constant 0 : i32
    return %c0_i32, %c0_i32_0 : i32, i32
  }
  func.func @transform_18(%arg0: i32) -> (i32, i32) {
    %c0_i32 = arith.constant 0 : i32
    %c0_i32_0 = arith.constant 0 : i32
    %c0_i32_1 = arith.constant 0 : i32
    return %c0_i32, %c0_i32_0 : i32, i32
  }
  func.func @transform_19(%arg0: i32) -> (i32, i32) {
    %c0_i32 = arith.constant 0 : i32
    %c0_i32_0 = arith.constant 0 : i32
    return %arg0, %c0_i32 : i32, i32
  }
}

</mosaic_0001>

<llo_original>
// kernel: tpu_custom_call.1
$region0: #{tpu_custom_call.1}
  #allocation0 [shape = 'u32[]', space=smem, size = 0x4, offset = 0x4, fixed_abs, tag = 'smem constant byte address 0x4 - core index']
  #allocation1 [shape = 'u32[72,128]{1,0:T(1,128)}', space=vmem, size = 0x9000, scoped, tag = 'internal scratch']
  %s0 = inlined_call_operand.vmem [shape: f32[8,32], index: 0, kind: input, shape index: {}]
  %s1 = inlined_call_operand.vmem [shape: bf16[32,64], index: 1, kind: input, shape index: {}]
  %s2 = inlined_call_operand.vmem [shape: f32[1,64], index: 2, kind: input, shape index: {}]
  %s3 = inlined_call_operand.vmem [shape: bf16[64,2], index: 3, kind: input, shape index: {}]
  %s4 = inlined_call_operand.vmem [shape: f32[1,2], index: 4, kind: input, shape index: {}]
  %s5 = inlined_call_operand.vmem [shape: bf16[2,256], index: 5, kind: input, shape index: {}]
  %s6 = inlined_call_operand.vmem [shape: f32[1,256], index: 6, kind: input, shape index: {}]
  %s7 = inlined_call_operand.vmem [shape: bf16[64,256], index: 7, kind: input, shape index: {}]
  %s8 = inlined_call_operand.hbm [shape: bf16[64,256], index: 8, kind: input, shape index: {}]
  %s9 = inlined_call_operand.vmem [shape: f32[1,256], index: 9, kind: input, shape index: {}]
  %s10 = inlined_call_operand.hbm [shape: bf16[64,256], index: 10, kind: input, shape index: {}]
  %s11 = inlined_call_operand.hbm [shape: bf16[64,256], index: 11, kind: input, shape index: {}]
  %s12 = inlined_call_operand.vmem [shape: f32[1,256], index: 12, kind: input, shape index: {}]
  %s13 = inlined_call_operand.vmem [shape: bf16[64,2], index: 13, kind: input, shape index: {}]
  %s14 = inlined_call_operand.vmem [shape: f32[1,2], index: 14, kind: input, shape index: {}]
  %s15 = inlined_call_operand.vmem [shape: bf16[2,64], index: 15, kind: input, shape index: {}]
  %s16 = inlined_call_operand.vmem [shape: f32[1,64], index: 16, kind: input, shape index: {}]
  %s17 = inlined_call_operand.vmem [shape: bf16[64,32], index: 17, kind: input, shape index: {}]
  %s18 = inlined_call_operand.vmem [shape: f32[1,32], index: 18, kind: input, shape index: {}]
  %s19 = inlined_call_operand.hbm [shape: f32[8,32], index: 19, kind: output, shape index: {}]
  %s20 = sld [smem:[#allocation0]]
  $region98: #{tpu_custom_call.1} parent=0
    _
  %s22 = ssub.s32 1, %s20
  %s23 = scalar_select 0, %s22, %s20
  $region1: #{tpu_custom_call.1} parent=0
    #allocation2 [shape = 'u8[32768]{0}', space=vmem, size = 0x8000, scoped, tag = 'input window, operand 8, single buffered']
    #allocation3 [shape = 's32[1]{0}', space=sflag, size = 0x4, scoped, tag = 'scoped memory for tpu_custom_call.1']
    #allocation4 [shape = 's32[1]{0}', space=sflag, size = 0x4, scoped, tag = 'scoped memory for tpu_custom_call.1']
    #allocation5 [shape = 'u8[32768]{0}', space=vmem, size = 0x8000, scoped, tag = 'input window, operand 10, single buffered']
    #allocation6 [shape = 's32[1]{0}', space=sflag, size = 0x4, scoped, tag = 'scoped memory for tpu_custom_call.1']
    #allocation7 [shape = 'u8[32768]{0}', space=vmem, size = 0x8000, scoped, tag = 'input window, operand 11, single buffered']
    #allocation8 [shape = 'u8[4096]{0}', space=vmem, size = 0x1000, scoped, tag = 'output window, operand 0, single buffered']
    %24 = vsyncpa [#allocation3], 0
    %25 = vsyncpa [#allocation6], 0
    %26 = vsyncpa [#allocation4], 0
    // Predicated region
    $region2: #{tpu_custom_call.1} parent=1 // pred_check
      _
    $region3: #{tpu_custom_call.1} parent=1 // pred_check_branch
      %28 = sbr.rel (0) target = $region5
    $region4: #{tpu_custom_call.1} parent=1 // pred_region
      _
    $region5: #{tpu_custom_call.1} parent=1 // pred_fallthru
      _
    // Predicated region
    $region6: #{tpu_custom_call.1} parent=1 // pred_check
      _
    $region7: #{tpu_custom_call.1} parent=1 // pred_check_branch
      %30 = sbr.rel (0) target = $region9
    $region8: #{tpu_custom_call.1} parent=1 // pred_region
      _
    $region9: #{tpu_custom_call.1} parent=1 // pred_fallthru
      _
    // Predicated region
    $region10: #{tpu_custom_call.1} parent=1 // pred_check
      _
    $region11: #{tpu_custom_call.1} parent=1 // pred_check_branch
      %32 = sbr.rel (0) target = $region13
    $region12: #{tpu_custom_call.1} parent=1 // pred_region
      _
    $region13: #{tpu_custom_call.1} parent=1 // pred_fallthru
      _
    // Predicated region
    $region14: #{tpu_custom_call.1} parent=1 // pred_check
      _
    $region15: #{tpu_custom_call.1} parent=1 // pred_check_branch
      %34 = sbr.rel (0) target = $region17
    $region16: #{tpu_custom_call.1} parent=1 // pred_region
      _
    $region17: #{tpu_custom_call.1} parent=1 // pred_fallthru
      _
    // Predicated region
    $region18: #{tpu_custom_call.1} parent=1 // pred_check
      _
    $region19: #{tpu_custom_call.1} parent=1 // pred_check_branch
      %36 = sbr.rel (0) target = $region21
    $region20: #{tpu_custom_call.1} parent=1 // pred_region
      _
    $region21: #{tpu_custom_call.1} parent=1 // pred_fallthru
      _
    // Predicated region
    $region22: #{tpu_custom_call.1} parent=1 // pred_check
      _
    $region23: #{tpu_custom_call.1} parent=1 // pred_check_branch
      %38 = sbr.rel (0) target = $region25
    $region24: #{tpu_custom_call.1} parent=1 // pred_region
      _
    $region25: #{tpu_custom_call.1} parent=1 // pred_fallthru
      _
    // Predicated region
    $region26: #{tpu_custom_call.1} parent=1 // pred_check
      _
    $region27: #{tpu_custom_call.1} parent=1 // pred_check_branch
      %40 = sbr.rel (0) target = $region29
    $region28: #{tpu_custom_call.1} parent=1 // pred_region
      _
    $region29: #{tpu_custom_call.1} parent=1 // pred_fallthru
      _
    // Predicated region
    $region30: #{tpu_custom_call.1} parent=1 // pred_check
      _
    $region31: #{tpu_custom_call.1} parent=1 // pred_check_branch
      %42 = sbr.rel (0) target = $region33
    $region32: #{tpu_custom_call.1} parent=1 // pred_region
      _
    $region33: #{tpu_custom_call.1} parent=1 // pred_fallthru
      _
    // Predicated region
    $region34: #{tpu_custom_call.1} parent=1 // pred_check
      _
    $region35: #{tpu_custom_call.1} parent=1 // pred_check_branch
      %44 = sbr.rel (0) target = $region37
    $region36: #{tpu_custom_call.1} parent=1 // pred_region
      %46 = vsyncadd [#allocation3], 0
      %s47 = sshll.u32 %s8, 4
      %s48 = int_to_ptr.hbm [resolvable:$true] %s47
      %s49 = sshll.u32 [#allocation2], 4
      %s50 = int_to_ptr.vmem [resolvable:$true] %s49
      %55 = dma.hbm_to_vmem [thread:$0]  %s48, 1024, %s50, [#allocation3], 128, 128, 8
    $region37: #{tpu_custom_call.1} parent=1 // pred_fallthru
      _
    // Predicated region
    $region38: #{tpu_custom_call.1} parent=1 // pred_check
      _
    $region39: #{tpu_custom_call.1} parent=1 // pred_check_branch
      %57 = sbr.rel (0) target = $region41
    $region40: #{tpu_custom_call.1} parent=1 // pred_region
      _
    $region41: #{tpu_custom_call.1} parent=1 // pred_fallthru
      _
    // Predicated region
    $region42: #{tpu_custom_call.1} parent=1 // pred_check
      _
    $region43: #{tpu_custom_call.1} parent=1 // pred_check_branch
      %59 = sbr.rel (0) target = $region45
    $region44: #{tpu_custom_call.1} parent=1 // pred_region
      %61 = vsyncadd [#allocation6], 0
      %s62 = sshll.u32 %s10, 4
      %s63 = int_to_ptr.hbm [resolvable:$true] %s62
      %s64 = sshll.u32 [#allocation5], 4
      %s65 = int_to_ptr.vmem [resolvable:$true] %s64
      %70 = dma.hbm_to_vmem [thread:$0]  %s63, 1024, %s65, [#allocation6], 128, 128, 8
    $region45: #{tpu_custom_call.1} parent=1 // pred_fallthru
      _
    // Predicated region
    $region46: #{tpu_custom_call.1} parent=1 // pred_check
      _
    $region47: #{tpu_custom_call.1} parent=1 // pred_check_branch
      %72 = sbr.rel (0) target = $region49
    $region48: #{tpu_custom_call.1} parent=1 // pred_region
      %74 = vsyncadd [#allocation6], 0
      %s75 = sshll.u32 %s11, 4
      %s76 = int_to_ptr.hbm [resolvable:$true] %s75
      %s77 = sshll.u32 [#allocation7], 4
      %s78 = int_to_ptr.vmem [resolvable:$true] %s77
      %83 = dma.hbm_to_vmem [thread:$0]  %s76, 1024, %s78, [#allocation6], 128, 128, 8
    $region49: #{tpu_custom_call.1} parent=1 // pred_fallthru
      _
    // Predicated region
    $region50: #{tpu_custom_call.1} parent=1 // pred_check
      _
    $region51: #{tpu_custom_call.1} parent=1 // pred_check_branch
      %85 = sbr.rel (0) target = $region53
    $region52: #{tpu_custom_call.1} parent=1 // pred_region
      _
    $region53: #{tpu_custom_call.1} parent=1 // pred_fallthru
      _
    // Predicated region
    $region54: #{tpu_custom_call.1} parent=1 // pred_check
      _
    $region55: #{tpu_custom_call.1} parent=1 // pred_check_branch
      %87 = sbr.rel (0) target = $region57
    $region56: #{tpu_custom_call.1} parent=1 // pred_region
      _
    $region57: #{tpu_custom_call.1} parent=1 // pred_fallthru
      _
    // Predicated region
    $region58: #{tpu_custom_call.1} parent=1 // pred_check
      _
    $region59: #{tpu_custom_call.1} parent=1 // pred_check_branch
      %89 = sbr.rel (0) target = $region61
    $region60: #{tpu_custom_call.1} parent=1 // pred_region
      _
    $region61: #{tpu_custom_call.1} parent=1 // pred_fallthru
      _
    // Predicated region
    $region62: #{tpu_custom_call.1} parent=1 // pred_check
      _
    $region63: #{tpu_custom_call.1} parent=1 // pred_check_branch
      %91 = sbr.rel (0) target = $region65
    $region64: #{tpu_custom_call.1} parent=1 // pred_region
      _
    $region65: #{tpu_custom_call.1} parent=1 // pred_fallthru
      _
    // Predicated region
    $region66: #{tpu_custom_call.1} parent=1 // pred_check
      _
    $region67: #{tpu_custom_call.1} parent=1 // pred_check_branch
      %93 = sbr.rel (0) target = $region69
    $region68: #{tpu_custom_call.1} parent=1 // pred_region
      _
    $region69: #{tpu_custom_call.1} parent=1 // pred_fallthru
      _
    // Predicated region
    $region70: #{tpu_custom_call.1} parent=1 // pred_check
      _
    $region71: #{tpu_custom_call.1} parent=1 // pred_check_branch
      %95 = sbr.rel (0) target = $region73
    $region72: #{tpu_custom_call.1} parent=1 // pred_region
      _
    $region73: #{tpu_custom_call.1} parent=1 // pred_fallthru
      _
    // Predicated region
    $region74: #{tpu_custom_call.1} parent=1 // pred_check
      _
    $region75: #{tpu_custom_call.1} parent=1 // pred_check_branch
      %97 = sbr.rel (0) target = $region77
    $region76: #{tpu_custom_call.1} parent=1 // pred_region
      _
    $region77: #{tpu_custom_call.1} parent=1 // pred_fallthru
      _
    // Predicated region
    $region78: #{tpu_custom_call.1} parent=1 // pred_check
      _
    $region79: #{tpu_custom_call.1} parent=1 // pred_check_branch
      %99 = sbr.rel (0) target = $region81
    $region80: #{tpu_custom_call.1} parent=1 // pred_region
      %101 = dma.done [#allocation3], 1024
    $region81: #{tpu_custom_call.1} parent=1 // pred_fallthru
      _
    // Predicated region
    $region82: #{tpu_custom_call.1} parent=1 // pred_check
      _
    $region83: #{tpu_custom_call.1} parent=1 // pred_check_branch
      %103 = sbr.rel (0) target = $region85
    $region84: #{tpu_custom_call.1} parent=1 // pred_region
      %105 = dma.done [#allocation6], 1024
    $region85: #{tpu_custom_call.1} parent=1 // pred_fallthru
      _
    // Predicated region
    $region86: #{tpu_custom_call.1} parent=1 // pred_check
      _
    $region87: #{tpu_custom_call.1} parent=1 // pred_check_branch
      %107 = sbr.rel (0) target = $region89
    $region88: #{tpu_custom_call.1} parent=1 // pred_region
      %109 = dma.done [#allocation6], 1024
    $region89: #{tpu_custom_call.1} parent=1 // pred_fallthru
      _
    %v111 = vld [vmem:[%s0] sm:$0xff]
    %v112 = vpack.c.bf16 %v111, %v111
    %v113 = vld [vmem:[%s1] sm:$0xf]
    %v114 = vld [vmem:[%s1 + $0x4] sm:$0xf]
    %v115 = vld [vmem:[%s1 + $0x8] sm:$0xf]
    %v116 = vld [vmem:[%s1 + $0xc] sm:$0xf]
    %v117 = vld [vmem:[%s2] sm:$0x1]
    %v119 = vperm.slane %v117, 0
    %v125 = vunpack.c.l.b16 %v113
    %v126 = vunpack.c.l.b16 %v114
    %v127 = vunpack.c.l.b16 %v115
    %v128 = vunpack.c.l.b16 %v116
    %v129 = vpack.c.b16 %v126, %v125
    %v130 = vpack.c.b16 %v128, %v127
    %vm133 = vcmask 261120
    %v135 = vsel %vm133, %v112, 0
    %137 = vmatpush.bf16.msra.mxu0 0
    %138 = vmatpush.bf16.msra.mxu0 0
    %139 = vmatpush.bf16.msra.mxu0 0
    %140 = vmatpush.bf16.msra.mxu0 0
    %141 = vmatpush.bf16.msra.mxu0 0
    %142 = vmatpush.bf16.msra.mxu0 0
    %143 = vmatpush.bf16.msra.mxu0 %v130
    %144 = vmatpush.bf16.msra.mxu0 %v129
    %145 = vmatmul.bf16.gmra.mxu0 %v135
    %v146 = vpop.f32.mrf.mxu0
    %v147 = vadd.f32 %v119, %v146
    %v148 = vpop.f32.mrf.mxu0
    %149 = vdwg.mxu0
    %v150 = vmax.f32 %v147, 0.0
    %v151 = vpack.c.bf16 %v150, %v150
    %v152 = vld [vmem:[%s3] sm:$0xf]
    %v153 = vld [vmem:[%s3 + $0x4] sm:$0xf]
    %v154 = vld [vmem:[%s3 + $0x8] sm:$0xf]
    %v155 = vld [vmem:[%s3 + $0xc] sm:$0xf]
    %v156 = vld [vmem:[%s3 + $0x10] sm:$0xf]
    %v157 = vld [vmem:[%s3 + $0x14] sm:$0xf]
    %v158 = vld [vmem:[%s3 + $0x18] sm:$0xf]
    %v159 = vld [vmem:[%s3 + $0x1c] sm:$0xf]
    %v160 = vld [vmem:[%s4] sm:$0x1]
    %v162 = vperm.slane %v160, 0
    %v172 = vunpack.c.l.b16 %v152
    %v173 = vunpack.c.l.b16 %v153
    %v174 = vunpack.c.l.b16 %v154
    %v175 = vunpack.c.l.b16 %v155
    %v176 = vunpack.c.l.b16 %v156
    %v177 = vunpack.c.l.b16 %v157
    %v178 = vunpack.c.l.b16 %v158
    %v179 = vunpack.c.l.b16 %v159
    %v180 = vpack.c.b16 %v173, %v172
    %v181 = vpack.c.b16 %v175, %v174
    %v182 = vpack.c.b16 %v177, %v176
    %v183 = vpack.c.b16 %v179, %v178
    %vm188 = vcmask 523264
    %v190 = vsel %vm188, %v151, 0
    %192 = vmatpush.bf16.msra.mxu0 0
    %193 = vmatpush.bf16.msra.mxu0 0
    %194 = vmatpush.bf16.msra.mxu0 0
    %195 = vmatpush.bf16.msra.mxu0 0
    %196 = vmatpush.bf16.msra.mxu0 %v183
    %197 = vmatpush.bf16.msra.mxu0 %v182
    %198 = vmatpush.bf16.msra.mxu0 %v181
    %199 = vmatpush.bf16.msra.mxu0 %v180
    %200 = vmatmul.bf16.gmra.mxu0 %v190
    %v201 = vpop.f32.mrf.mxu0
    %v202 = vadd.f32 %v162, %v201
    %v203 = vpop.f32.mrf.mxu0
    %204 = vdwg.mxu0
    %v205 = vpack.c.bf16 %v202, %v202
    %v206 = vld [vmem:[%s5] sm:$0x3]
    %v207 = vld [vmem:[%s6] sm:$0x3]
    %v209 = vperm.slane %v207, 0
    %v210 = vperm.slane %v207, 1
    %214 = vst [vmem:[#allocation1] ss:$9 sm:$0xff] %v206
    %v215 = vld [vmem:[#allocation1] sm:$0xff]
    %v216 = vld [vmem:[#allocation1 + $0x9] sm:$0xff]
    %vm217 = vcmask 15360
    %v219 = vsel %vm217, %v205, 0
    %vm221 = vcmask 1040384
    %v222 = vsel %vm221, %v215, 0
    %v224 = vsel %vm221, %v216, 0
    %226 = vmatpush.bf16.msra.mxu0 0
    %227 = vmatpush.bf16.msra.mxu0 0
    %228 = vmatpush.bf16.msra.mxu0 0
    %229 = vmatpush.bf16.msra.mxu0 0
    %230 = vmatpush.bf16.msra.mxu0 0
    %231 = vmatpush.bf16.msra.mxu0 0
    %232 = vmatpush.bf16.msra.mxu0 0
    %233 = vmatpush.bf16.msra.mxu0 %v222
    %234 = vmatmul.bf16.gmra.mxu0 %v219
    %v235 = vpop.f32.mrf.mxu0
    %v236 = vadd.f32 %v209, %v235
    %v237 = vpop.f32.mrf.mxu0
    %238 = vdwg.mxu0
    %239 = vmatpush.bf16.msra.mxu0 0
    %240 = vmatpush.bf16.msra.mxu0 0
    %241 = vmatpush.bf16.msra.mxu0 0
    %242 = vmatpush.bf16.msra.mxu0 0
    %243 = vmatpush.bf16.msra.mxu0 0
    %244 = vmatpush.bf16.msra.mxu0 0
    %245 = vmatpush.bf16.msra.mxu0 0
    %246 = vmatpush.bf16.msra.mxu0 %v224
    %247 = vmatmul.bf16.gmra.mxu0 %v219
    %v248 = vpop.f32.mrf.mxu0
    %v249 = vadd.f32 %v210, %v248
    %v250 = vpop.f32.mrf.mxu0
    %251 = vdwg.mxu0
    %v252 = vxor.u32 %v236, 2147483648
    %v253 = vmul.f32 %v252, 1.442695
    %v254 = vpow.pop %v253
    %v255 = vadd.f32 %v254, 1.0
    %v256 = vrcp.pop %v255
    %v257 = vmul.f32 %v255, %v256
    %v258 = vsub.f32 1.0, %v257
    %v259 = vmul.f32 %v256, %v258
    %v260 = vadd.f32 %v256, %v259
    %vm261 = vweird.f32 %v255
    %vm262 = vweird.f32 %v256
    %vm263 = vmor %vm261, %vm262
    %v264 = vsel %vm263, %v256, %v260
    %v265 = vand.u32 2147483647, %v255
    %vm266 = vcmp.eq.f32.partialorder %v265, 8.507059e+37
    %v267 = vand.u32 %v255, 2147483648
    %v268 = vor.u32 1.1754944e-38, %v267
    %v269 = vsel %vm266, %v268, %v264
    %v270 = vmul.f32 1.0, %v269
    %v271 = vtanh.pop %v249
    %v272 = vxor.u32 %v249, 2147483648
    %v273 = vmul.f32 %v272, 1.442695
    %v274 = vpow.pop %v273
    %v275 = vadd.f32 %v274, 1.0
    %v276 = vrcp.pop %v275
    %v277 = vmul.f32 %v275, %v276
    %v278 = vsub.f32 1.0, %v277
    %v279 = vmul.f32 %v276, %v278
    %v280 = vadd.f32 %v276, %v279
    %vm281 = vweird.f32 %v275
    %vm282 = vweird.f32 %v276
    %vm283 = vmor %vm281, %vm282
    %v284 = vsel %vm283, %v276, %v280
    %v285 = vand.u32 2147483647, %v275
    %vm286 = vcmp.eq.f32.partialorder %v285, 8.507059e+37
    %v287 = vand.u32 %v275, 2147483648
    %v288 = vor.u32 1.1754944e-38, %v287
    %v289 = vsel %vm286, %v288, %v284
    %v290 = vmul.f32 1.0, %v289
    %v291 = vmul.f32 %v270, %v271
    %v292 = vtanh.pop %v291
    %294 = vrot.lane.b32.xlu0 %v292, 64
    %v295 = vpop.permute.xlu0 %294
    %v297 = vmul.f32 %v290, %v295
    %v298 = vpack.c.bf16 %v297, %v297
    %v299 = vld [vmem:[#allocation5] sm:$0xff]
    %v300 = vld [vmem:[#allocation5 + $0x8] sm:$0xff]
    %v301 = vld [vmem:[#allocation5 + $0x10] sm:$0xff]
    %v302 = vld [vmem:[#allocation5 + $0x18] sm:$0xff]
    %v303 = vld [vmem:[#allocation5 + $0x20] sm:$0xff]
    %v304 = vld [vmem:[#allocation5 + $0x28] sm:$0xff]
    %v305 = vld [vmem:[#allocation5 + $0x30] sm:$0xff]
    %v306 = vld [vmem:[#allocation5 + $0x38] sm:$0xff]
    %v307 = vld [vmem:[%s12] sm:$0x3]
    %v309 = vperm.slane %v307, 0
    %v310 = vperm.slane %v307, 1
    %314 = vrot.lane.b32.xlu0 %v298, 64
    %v315 = vpop.permute.xlu0 %314
    %v324 = vunpack.c.l.b16 %v299
    %v325 = vunpack.c.h.b16 %v299
    %v326 = vunpack.c.l.b16 %v300
    %v327 = vunpack.c.h.b16 %v300
    %v328 = vunpack.c.l.b16 %v301
    %v329 = vunpack.c.h.b16 %v301
    %v330 = vunpack.c.l.b16 %v302
    %v331 = vunpack.c.h.b16 %v302
    %v332 = vunpack.c.l.b16 %v303
    %v333 = vunpack.c.h.b16 %v303
    %v334 = vunpack.c.l.b16 %v304
    %v335 = vunpack.c.h.b16 %v304
    %v336 = vunpack.c.l.b16 %v305
    %v337 = vunpack.c.h.b16 %v305
    %v338 = vunpack.c.l.b16 %v306
    %v339 = vunpack.c.h.b16 %v306
    %v340 = vpack.c.b16 %v326, %v324
    %v341 = vpack.c.b16 %v327, %v325
    %v342 = vpack.c.b16 %v330, %v328
    %v343 = vpack.c.b16 %v331, %v329
    %v344 = vpack.c.b16 %v334, %v332
    %v345 = vpack.c.b16 %v335, %v333
    %v346 = vpack.c.b16 %v338, %v336
    %v347 = vpack.c.b16 %v339, %v337
    %v357 = vsel %vm188, %v315, 0
    %359 = vmatpush.bf16.msra.mxu0 0
    %360 = vmatpush.bf16.msra.mxu0 0
    %361 = vmatpush.bf16.msra.mxu0 0
    %362 = vmatpush.bf16.msra.mxu0 0
    %363 = vmatpush.bf16.msra.mxu0 %v346
    %364 = vmatpush.bf16.msra.mxu0 %v344
    %365 = vmatpush.bf16.msra.mxu0 %v342
    %366 = vmatpush.bf16.msra.mxu0 %v340
    %367 = vmatmul.bf16.gmra.mxu0 %v357
    %v368 = vpop.f32.mrf.mxu0
    %v369 = vadd.f32 %v309, %v368
    %v370 = vpop.f32.mrf.mxu0
    %371 = vdwg.mxu0
    %372 = vmatpush.bf16.msra.mxu0 0
    %373 = vmatpush.bf16.msra.mxu0 0
    %374 = vmatpush.bf16.msra.mxu0 0
    %375 = vmatpush.bf16.msra.mxu0 0
    %376 = vmatpush.bf16.msra.mxu0 %v347
    %377 = vmatpush.bf16.msra.mxu0 %v345
    %378 = vmatpush.bf16.msra.mxu0 %v343
    %379 = vmatpush.bf16.msra.mxu0 %v341
    %380 = vmatmul.bf16.gmra.mxu0 %v357
    %v381 = vpop.f32.mrf.mxu0
    %v382 = vadd.f32 %v310, %v381
    %v383 = vpop.f32.mrf.mxu0
    %384 = vdwg.mxu0
    %v385 = vxor.u32 %v369, 2147483648
    %v386 = vmul.f32 %v385, 1.442695
    %v387 = vpow.pop %v386
    %v388 = vadd.f32 %v387, 1.0
    %v389 = vrcp.pop %v388
    %v390 = vmul.f32 %v388, %v389
    %v391 = vsub.f32 1.0, %v390
    %v392 = vmul.f32 %v389, %v391
    %v393 = vadd.f32 %v389, %v392
    %vm394 = vweird.f32 %v388
    %vm395 = vweird.f32 %v389
    %vm396 = vmor %vm394, %vm395
    %v397 = vsel %vm396, %v389, %v393
    %v398 = vand.u32 2147483647, %v388
    %vm399 = vcmp.eq.f32.partialorder %v398, 8.507059e+37
    %v400 = vand.u32 %v388, 2147483648
    %v401 = vor.u32 1.1754944e-38, %v400
    %v402 = vsel %vm399, %v401, %v397
    %v403 = vmul.f32 1.0, %v402
    %v404 = vtanh.pop %v382
    %v405 = vxor.u32 %v382, 2147483648
    %v406 = vmul.f32 %v405, 1.442695
    %v407 = vpow.pop %v406
    %v408 = vadd.f32 %v407, 1.0
    %v409 = vrcp.pop %v408
    %v410 = vmul.f32 %v408, %v409
    %v411 = vsub.f32 1.0, %v410
    %v412 = vmul.f32 %v409, %v411
    %v413 = vadd.f32 %v409, %v412
    %vm414 = vweird.f32 %v408
    %vm415 = vweird.f32 %v409
    %vm416 = vmor %vm414, %vm415
    %v417 = vsel %vm416, %v409, %v413
    %v418 = vand.u32 2147483647, %v408
    %vm419 = vcmp.eq.f32.partialorder %v418, 8.507059e+37
    %v420 = vand.u32 %v408, 2147483648
    %v421 = vor.u32 1.1754944e-38, %v420
    %v422 = vsel %vm419, %v421, %v417
    %v423 = vmul.f32 1.0, %v422
    %v424 = vmul.f32 %v403, %v404
    %v425 = vtanh.pop %v424
    %427 = vrot.lane.b32.xlu0 %v425, 64
    %v428 = vpop.permute.xlu0 %427
    %v430 = vmul.f32 %v423, %v428
    %v431 = vld [vmem:[%s9] sm:$0x3]
    %v433 = vperm.slane %v431, 0
    %v434 = vperm.slane %v431, 1
    %v437 = vpack.c.bf16 %v430, %v430
    %v438 = vld [vmem:[%s7] sm:$0xff]
    %v439 = vld [vmem:[%s7 + $0x8] sm:$0xff]
    %v440 = vld [vmem:[%s7 + $0x10] sm:$0xff]
    %v441 = vld [vmem:[%s7 + $0x18] sm:$0xff]
    %v442 = vld [vmem:[%s7 + $0x20] sm:$0xff]
    %v443 = vld [vmem:[%s7 + $0x28] sm:$0xff]
    %v444 = vld [vmem:[%s7 + $0x30] sm:$0xff]
    %v445 = vld [vmem:[%s7 + $0x38] sm:$0xff]
    %v446 = vld [vmem:[#allocation2] sm:$0xff]
    %v447 = vld [vmem:[#allocation2 + $0x8] sm:$0xff]
    %v448 = vld [vmem:[#allocation2 + $0x10] sm:$0xff]
    %v449 = vld [vmem:[#allocation2 + $0x18] sm:$0xff]
    %v450 = vld [vmem:[#allocation2 + $0x20] sm:$0xff]
    %v451 = vld [vmem:[#allocation2 + $0x28] sm:$0xff]
    %v452 = vld [vmem:[#allocation2 + $0x30] sm:$0xff]
    %v453 = vld [vmem:[#allocation2 + $0x38] sm:$0xff]
    %v462 = vunpack.c.l.b16 %v446
    %v463 = vunpack.c.h.b16 %v446
    %v464 = vunpack.c.l.b16 %v447
    %v465 = vunpack.c.h.b16 %v447
    %v466 = vunpack.c.l.b16 %v448
    %v467 = vunpack.c.h.b16 %v448
    %v468 = vunpack.c.l.b16 %v449
    %v469 = vunpack.c.h.b16 %v449
    %v470 = vunpack.c.l.b16 %v450
    %v471 = vunpack.c.h.b16 %v450
    %v472 = vunpack.c.l.b16 %v451
    %v473 = vunpack.c.h.b16 %v451
    %v474 = vunpack.c.l.b16 %v452
    %v475 = vunpack.c.h.b16 %v452
    %v476 = vunpack.c.l.b16 %v453
    %v477 = vunpack.c.h.b16 %v453
    %v478 = vpack.c.b16 %v464, %v462
    %v479 = vpack.c.b16 %v465, %v463
    %v480 = vpack.c.b16 %v468, %v466
    %v481 = vpack.c.b16 %v469, %v467
    %v482 = vpack.c.b16 %v472, %v470
    %v483 = vpack.c.b16 %v473, %v471
    %v484 = vpack.c.b16 %v476, %v474
    %v485 = vpack.c.b16 %v477, %v475
    %494 = vmatpush.bf16.msra.mxu0 0
    %495 = vmatpush.bf16.msra.mxu0 0
    %496 = vmatpush.bf16.msra.mxu0 0
    %497 = vmatpush.bf16.msra.mxu0 0
    %498 = vmatpush.bf16.msra.mxu0 %v484
    %499 = vmatpush.bf16.msra.mxu0 %v482
    %500 = vmatpush.bf16.msra.mxu0 %v480
    %501 = vmatpush.bf16.msra.mxu0 %v478
    %502 = vmatmul.bf16.gmra.mxu0 %v357
    %v503 = vpop.f32.mrf.mxu0
    %v504 = vadd.f32 0.0, %v503
    %v505 = vpop.f32.mrf.mxu0
    %506 = vdwg.mxu0
    %507 = vmatpush.bf16.msra.mxu0 0
    %508 = vmatpush.bf16.msra.mxu0 0
    %509 = vmatpush.bf16.msra.mxu0 0
    %510 = vmatpush.bf16.msra.mxu0 0
    %511 = vmatpush.bf16.msra.mxu0 %v485
    %512 = vmatpush.bf16.msra.mxu0 %v483
    %513 = vmatpush.bf16.msra.mxu0 %v481
    %514 = vmatpush.bf16.msra.mxu0 %v479
    %515 = vmatmul.bf16.gmra.mxu0 %v357
    %v516 = vpop.f32.mrf.mxu0
    %v517 = vadd.f32 0.0, %v516
    %v518 = vpop.f32.mrf.mxu0
    %519 = vdwg.mxu0
    %521 = vrot.lane.b32.xlu0 %v437, 64
    %v522 = vpop.permute.xlu0 %521
    %v531 = vunpack.c.l.b16 %v438
    %v532 = vunpack.c.h.b16 %v438
    %v533 = vunpack.c.l.b16 %v439
    %v534 = vunpack.c.h.b16 %v439
    %v535 = vunpack.c.l.b16 %v440
    %v536 = vunpack.c.h.b16 %v440
    %v537 = vunpack.c.l.b16 %v441
    %v538 = vunpack.c.h.b16 %v441
    %v539 = vunpack.c.l.b16 %v442
    %v540 = vunpack.c.h.b16 %v442
    %v541 = vunpack.c.l.b16 %v443
    %v542 = vunpack.c.h.b16 %v443
    %v543 = vunpack.c.l.b16 %v444
    %v544 = vunpack.c.h.b16 %v444
    %v545 = vunpack.c.l.b16 %v445
    %v546 = vunpack.c.h.b16 %v445
    %v547 = vpack.c.b16 %v533, %v531
    %v548 = vpack.c.b16 %v534, %v532
    %v549 = vpack.c.b16 %v537, %v535
    %v550 = vpack.c.b16 %v538, %v536
    %v551 = vpack.c.b16 %v541, %v539
    %v552 = vpack.c.b16 %v542, %v540
    %v553 = vpack.c.b16 %v545, %v543
    %v554 = vpack.c.b16 %v546, %v544
    %v564 = vsel %vm188, %v522, 0
    %566 = vmatpush.bf16.msra.mxu0 0
    %567 = vmatpush.bf16.msra.mxu0 0
    %568 = vmatpush.bf16.msra.mxu0 0
    %569 = vmatpush.bf16.msra.mxu0 0
    %570 = vmatpush.bf16.msra.mxu0 %v553
    %571 = vmatpush.bf16.msra.mxu0 %v551
    %572 = vmatpush.bf16.msra.mxu0 %v549
    %573 = vmatpush.bf16.msra.mxu0 %v547
    %574 = vmatmul.bf16.gmra.mxu0 %v564
    %v575 = vpop.f32.mrf.mxu0
    %v576 = vadd.f32 %v504, %v575
    %v577 = vpop.f32.mrf.mxu0
    %578 = vdwg.mxu0
    %579 = vmatpush.bf16.msra.mxu0 0
    %580 = vmatpush.bf16.msra.mxu0 0
    %581 = vmatpush.bf16.msra.mxu0 0
    %582 = vmatpush.bf16.msra.mxu0 0
    %583 = vmatpush.bf16.msra.mxu0 %v554
    %584 = vmatpush.bf16.msra.mxu0 %v552
    %585 = vmatpush.bf16.msra.mxu0 %v550
    %586 = vmatpush.bf16.msra.mxu0 %v548
    %587 = vmatmul.bf16.gmra.mxu0 %v564
    %v588 = vpop.f32.mrf.mxu0
    %v589 = vadd.f32 %v517, %v588
    %v590 = vpop.f32.mrf.mxu0
    %591 = vdwg.mxu0
    %v592 = vadd.f32 %v576, %v433
    %v593 = vadd.f32 %v589, %v434
    %v594 = vxor.u32 %v592, 2147483648
    %v595 = vmul.f32 %v594, 1.442695
    %v596 = vpow.pop %v595
    %v597 = vadd.f32 %v596, 1.0
    %v598 = vrcp.pop %v597
    %v599 = vmul.f32 %v597, %v598
    %v600 = vsub.f32 1.0, %v599
    %v601 = vmul.f32 %v598, %v600
    %v602 = vadd.f32 %v598, %v601
    %vm603 = vweird.f32 %v597
    %vm604 = vweird.f32 %v598
    %vm605 = vmor %vm603, %vm604
    %v606 = vsel %vm605, %v598, %v602
    %v607 = vand.u32 2147483647, %v597
    %vm608 = vcmp.eq.f32.partialorder %v607, 8.507059e+37
    %v609 = vand.u32 %v597, 2147483648
    %v610 = vor.u32 1.1754944e-38, %v609
    %v611 = vsel %vm608, %v610, %v606
    %v612 = vmul.f32 1.0, %v611
    %v613 = vtanh.pop %v593
    %v614 = vxor.u32 %v593, 2147483648
    %v615 = vmul.f32 %v614, 1.442695
    %v616 = vpow.pop %v615
    %v617 = vadd.f32 %v616, 1.0
    %v618 = vrcp.pop %v617
    %v619 = vmul.f32 %v617, %v618
    %v620 = vsub.f32 1.0, %v619
    %v621 = vmul.f32 %v618, %v620
    %v622 = vadd.f32 %v618, %v621
    %vm623 = vweird.f32 %v617
    %vm624 = vweird.f32 %v618
    %vm625 = vmor %vm623, %vm624
    %v626 = vsel %vm625, %v618, %v622
    %v627 = vand.u32 2147483647, %v617
    %vm628 = vcmp.eq.f32.partialorder %v627, 8.507059e+37
    %v629 = vand.u32 %v617, 2147483648
    %v630 = vor.u32 1.1754944e-38, %v629
    %v631 = vsel %vm628, %v630, %v626
    %v632 = vmul.f32 1.0, %v631
    %634 = vrot.lane.b32.xlu0 %v291, 64
    %v635 = vpop.permute.xlu0 %634
    %v637 = vmul.f32 %v612, %v635
    %v638 = vmul.f32 %v612, %v613
    %640 = vrot.lane.b32.xlu0 %v638, 64
    %v641 = vpop.permute.xlu0 %640
    %v643 = vadd.f32 %v637, %v641
    %v644 = vtanh.pop %v643
    %v645 = vmul.f32 %v632, %v644
    %v646 = vpack.c.bf16 %v645, %v645
    %v647 = vld [vmem:[#allocation7] sm:$0xff]
    %v648 = vld [vmem:[#allocation7 + $0x8] sm:$0xff]
    %v649 = vld [vmem:[#allocation7 + $0x10] sm:$0xff]
    %v650 = vld [vmem:[#allocation7 + $0x18] sm:$0xff]
    %v651 = vld [vmem:[#allocation7 + $0x20] sm:$0xff]
    %v652 = vld [vmem:[#allocation7 + $0x28] sm:$0xff]
    %v653 = vld [vmem:[#allocation7 + $0x30] sm:$0xff]
    %v654 = vld [vmem:[#allocation7 + $0x38] sm:$0xff]
    %v663 = vunpack.c.l.b16 %v647
    %v664 = vunpack.c.h.b16 %v647
    %v665 = vunpack.c.l.b16 %v648
    %v666 = vunpack.c.h.b16 %v648
    %v667 = vunpack.c.l.b16 %v649
    %v668 = vunpack.c.h.b16 %v649
    %v669 = vunpack.c.l.b16 %v650
    %v670 = vunpack.c.h.b16 %v650
    %v671 = vunpack.c.l.b16 %v651
    %v672 = vunpack.c.h.b16 %v651
    %v673 = vunpack.c.l.b16 %v652
    %v674 = vunpack.c.h.b16 %v652
    %v675 = vunpack.c.l.b16 %v653
    %v676 = vunpack.c.h.b16 %v653
    %v677 = vunpack.c.l.b16 %v654
    %v678 = vunpack.c.h.b16 %v654
    %v679 = vpack.c.b16 %v665, %v663
    %v680 = vpack.c.b16 %v666, %v664
    %v681 = vpack.c.b16 %v669, %v667
    %v682 = vpack.c.b16 %v670, %v668
    %v683 = vpack.c.b16 %v673, %v671
    %v684 = vpack.c.b16 %v674, %v672
    %v685 = vpack.c.b16 %v677, %v675
    %v686 = vpack.c.b16 %v678, %v676
    %695 = vmatpush.bf16.msra.mxu0 0
    %696 = vmatpush.bf16.msra.mxu0 0
    %697 = vmatpush.bf16.msra.mxu0 0
    %698 = vmatpush.bf16.msra.mxu0 0
    %699 = vmatpush.bf16.msra.mxu0 %v685
    %700 = vmatpush.bf16.msra.mxu0 %v683
    %701 = vmatpush.bf16.msra.mxu0 %v681
    %702 = vmatpush.bf16.msra.mxu0 %v679
    %703 = vmatmul.bf16.gmra.mxu0 %v564
    %v704 = vpop.f32.mrf.mxu0
    %v705 = vadd.f32 0.0, %v704
    %v706 = vpop.f32.mrf.mxu0
    %707 = vdwg.mxu0
    %708 = vmatpush.bf16.msra.mxu0 0
    %709 = vmatpush.bf16.msra.mxu0 0
    %710 = vmatpush.bf16.msra.mxu0 0
    %711 = vmatpush.bf16.msra.mxu0 0
    %712 = vmatpush.bf16.msra.mxu0 %v686
    %713 = vmatpush.bf16.msra.mxu0 %v684
    %714 = vmatpush.bf16.msra.mxu0 %v682
    %715 = vmatpush.bf16.msra.mxu0 %v680
    %716 = vmatmul.bf16.gmra.mxu0 %v564
    %v717 = vpop.f32.mrf.mxu0
    %v718 = vadd.f32 0.0, %v717
    %v719 = vpop.f32.mrf.mxu0
    %720 = vdwg.mxu0
    %722 = vrot.lane.b32.xlu0 %v646, 64
    %v723 = vpop.permute.xlu0 %722
    %v725 = vsel %vm188, %v723, 0
    %727 = vmatpush.bf16.msra.mxu0 0
    %728 = vmatpush.bf16.msra.mxu0 0
    %729 = vmatpush.bf16.msra.mxu0 0
    %730 = vmatpush.bf16.msra.mxu0 0
    %731 = vmatpush.bf16.msra.mxu0 %v346
    %732 = vmatpush.bf16.msra.mxu0 %v344
    %733 = vmatpush.bf16.msra.mxu0 %v342
    %734 = vmatpush.bf16.msra.mxu0 %v340
    %735 = vmatmul.bf16.gmra.mxu0 %v725
    %v736 = vpop.f32.mrf.mxu0
    %v737 = vadd.f32 %v705, %v736
    %v738 = vpop.f32.mrf.mxu0
    %739 = vdwg.mxu0
    %740 = vmatpush.bf16.msra.mxu0 0
    %741 = vmatpush.bf16.msra.mxu0 0
    %742 = vmatpush.bf16.msra.mxu0 0
    %743 = vmatpush.bf16.msra.mxu0 0
    %744 = vmatpush.bf16.msra.mxu0 %v347
    %745 = vmatpush.bf16.msra.mxu0 %v345
    %746 = vmatpush.bf16.msra.mxu0 %v343
    %747 = vmatpush.bf16.msra.mxu0 %v341
    %748 = vmatmul.bf16.gmra.mxu0 %v725
    %v749 = vpop.f32.mrf.mxu0
    %v750 = vadd.f32 %v718, %v749
    %v751 = vpop.f32.mrf.mxu0
    %752 = vdwg.mxu0
    %v753 = vadd.f32 %v737, %v309
    %v754 = vadd.f32 %v750, %v310
    %v755 = vxor.u32 %v753, 2147483648
    %v756 = vmul.f32 %v755, 1.442695
    %v757 = vpow.pop %v756
    %v758 = vadd.f32 %v757, 1.0
    %v759 = vrcp.pop %v758
    %v760 = vmul.f32 %v758, %v759
    %v761 = vsub.f32 1.0, %v760
    %v762 = vmul.f32 %v759, %v761
    %v763 = vadd.f32 %v759, %v762
    %vm764 = vweird.f32 %v758
    %vm765 = vweird.f32 %v759
    %vm766 = vmor %vm764, %vm765
    %v767 = vsel %vm766, %v759, %v763
    %v768 = vand.u32 2147483647, %v758
    %vm769 = vcmp.eq.f32.partialorder %v768, 8.507059e+37
    %v770 = vand.u32 %v758, 2147483648
    %v771 = vor.u32 1.1754944e-38, %v770
    %v772 = vsel %vm769, %v771, %v767
    %v773 = vmul.f32 1.0, %v772
    %v774 = vtanh.pop %v754
    %v775 = vxor.u32 %v754, 2147483648
    %v776 = vmul.f32 %v775, 1.442695
    %v777 = vpow.pop %v776
    %v778 = vadd.f32 %v777, 1.0
    %v779 = vrcp.pop %v778
    %v780 = vmul.f32 %v778, %v779
    %v781 = vsub.f32 1.0, %v780
    %v782 = vmul.f32 %v779, %v781
    %v783 = vadd.f32 %v779, %v782
    %vm784 = vweird.f32 %v778
    %vm785 = vweird.f32 %v779
    %vm786 = vmor %vm784, %vm785
    %v787 = vsel %vm786, %v779, %v783
    %v788 = vand.u32 2147483647, %v778
    %vm789 = vcmp.eq.f32.partialorder %v788, 8.507059e+37
    %v790 = vand.u32 %v778, 2147483648
    %v791 = vor.u32 1.1754944e-38, %v790
    %v792 = vsel %vm789, %v791, %v787
    %v793 = vmul.f32 1.0, %v792
    %795 = vrot.lane.b32.xlu0 %v424, 64
    %v796 = vpop.permute.xlu0 %795
    %v798 = vmul.f32 %v773, %v796
    %v799 = vmul.f32 %v773, %v774
    %801 = vrot.lane.b32.xlu0 %v799, 64
    %v802 = vpop.permute.xlu0 %801
    %v804 = vadd.f32 %v798, %v802
    %v805 = vtanh.pop %v804
    %v806 = vmul.f32 %v793, %v805
    %v807 = vpack.c.bf16 %v806, %v806
    %808 = vmatpush.bf16.msra.mxu0 0
    %809 = vmatpush.bf16.msra.mxu0 0
    %810 = vmatpush.bf16.msra.mxu0 0
    %811 = vmatpush.bf16.msra.mxu0 0
    %812 = vmatpush.bf16.msra.mxu0 %v484
    %813 = vmatpush.bf16.msra.mxu0 %v482
    %814 = vmatpush.bf16.msra.mxu0 %v480
    %815 = vmatpush.bf16.msra.mxu0 %v478
    %816 = vmatmul.bf16.gmra.mxu0 %v725
    %v817 = vpop.f32.mrf.mxu0
    %v818 = vadd.f32 0.0, %v817
    %v819 = vpop.f32.mrf.mxu0
    %820 = vdwg.mxu0
    %821 = vmatpush.bf16.msra.mxu0 0
    %822 = vmatpush.bf16.msra.mxu0 0
    %823 = vmatpush.bf16.msra.mxu0 0
    %824 = vmatpush.bf16.msra.mxu0 0
    %825 = vmatpush.bf16.msra.mxu0 %v485
    %826 = vmatpush.bf16.msra.mxu0 %v483
    %827 = vmatpush.bf16.msra.mxu0 %v481
    %828 = vmatpush.bf16.msra.mxu0 %v479
    %829 = vmatmul.bf16.gmra.mxu0 %v725
    %v830 = vpop.f32.mrf.mxu0
    %v831 = vadd.f32 0.0, %v830
    %v832 = vpop.f32.mrf.mxu0
    %833 = vdwg.mxu0
    %835 = vrot.lane.b32.xlu0 %v807, 64
    %v836 = vpop.permute.xlu0 %835
    %v838 = vsel %vm188, %v836, 0
    %840 = vmatpush.bf16.msra.mxu0 0
    %841 = vmatpush.bf16.msra.mxu0 0
    %842 = vmatpush.bf16.msra.mxu0 0
    %843 = vmatpush.bf16.msra.mxu0 0
    %844 = vmatpush.bf16.msra.mxu0 %v553
    %845 = vmatpush.bf16.msra.mxu0 %v551
    %846 = vmatpush.bf16.msra.mxu0 %v549
    %847 = vmatpush.bf16.msra.mxu0 %v547
    %848 = vmatmul.bf16.gmra.mxu0 %v838
    %v849 = vpop.f32.mrf.mxu0
    %v850 = vadd.f32 %v818, %v849
    %v851 = vpop.f32.mrf.mxu0
    %852 = vdwg.mxu0
    %853 = vmatpush.bf16.msra.mxu0 0
    %854 = vmatpush.bf16.msra.mxu0 0
    %855 = vmatpush.bf16.msra.mxu0 0
    %856 = vmatpush.bf16.msra.mxu0 0
    %857 = vmatpush.bf16.msra.mxu0 %v554
    %858 = vmatpush.bf16.msra.mxu0 %v552
    %859 = vmatpush.bf16.msra.mxu0 %v550
    %860 = vmatpush.bf16.msra.mxu0 %v548
    %861 = vmatmul.bf16.gmra.mxu0 %v838
    %v862 = vpop.f32.mrf.mxu0
    %v863 = vadd.f32 %v831, %v862
    %v864 = vpop.f32.mrf.mxu0
    %865 = vdwg.mxu0
    %v866 = vadd.f32 %v850, %v433
    %v867 = vadd.f32 %v863, %v434
    %v868 = vxor.u32 %v866, 2147483648
    %v869 = vmul.f32 %v868, 1.442695
    %v870 = vpow.pop %v869
    %v871 = vadd.f32 %v870, 1.0
    %v872 = vrcp.pop %v871
    %v873 = vmul.f32 %v871, %v872
    %v874 = vsub.f32 1.0, %v873
    %v875 = vmul.f32 %v872, %v874
    %v876 = vadd.f32 %v872, %v875
    %vm877 = vweird.f32 %v871
    %vm878 = vweird.f32 %v872
    %vm879 = vmor %vm877, %vm878
    %v880 = vsel %vm879, %v872, %v876
    %v881 = vand.u32 2147483647, %v871
    %vm882 = vcmp.eq.f32.partialorder %v881, 8.507059e+37
    %v883 = vand.u32 %v871, 2147483648
    %v884 = vor.u32 1.1754944e-38, %v883
    %v885 = vsel %vm882, %v884, %v880
    %v886 = vmul.f32 1.0, %v885
    %v887 = vtanh.pop %v867
    %v888 = vxor.u32 %v867, 2147483648
    %v889 = vmul.f32 %v888, 1.442695
    %v890 = vpow.pop %v889
    %v891 = vadd.f32 %v890, 1.0
    %v892 = vrcp.pop %v891
    %v893 = vmul.f32 %v891, %v892
    %v894 = vsub.f32 1.0, %v893
    %v895 = vmul.f32 %v892, %v894
    %v896 = vadd.f32 %v892, %v895
    %vm897 = vweird.f32 %v891
    %vm898 = vweird.f32 %v892
    %vm899 = vmor %vm897, %vm898
    %v900 = vsel %vm899, %v892, %v896
    %v901 = vand.u32 2147483647, %v891
    %vm902 = vcmp.eq.f32.partialorder %v901, 8.507059e+37
    %v903 = vand.u32 %v891, 2147483648
    %v904 = vor.u32 1.1754944e-38, %v903
    %v905 = vsel %vm902, %v904, %v900
    %v906 = vmul.f32 1.0, %v905
    %v907 = vmul.f32 %v886, %v643
    %v908 = vmul.f32 %v886, %v887
    %910 = vrot.lane.b32.xlu0 %v908, 64
    %v911 = vpop.permute.xlu0 %910
    %v913 = vadd.f32 %v907, %v911
    %v914 = vtanh.pop %v913
    %v915 = vmul.f32 %v906, %v914
    %v916 = vpack.c.bf16 %v915, %v915
    %917 = vmatpush.bf16.msra.mxu0 0
    %918 = vmatpush.bf16.msra.mxu0 0
    %919 = vmatpush.bf16.msra.mxu0 0
    %920 = vmatpush.bf16.msra.mxu0 0
    %921 = vmatpush.bf16.msra.mxu0 %v685
    %922 = vmatpush.bf16.msra.mxu0 %v683
    %923 = vmatpush.bf16.msra.mxu0 %v681
    %924 = vmatpush.bf16.msra.mxu0 %v679
    %925 = vmatmul.bf16.gmra.mxu0 %v838
    %v926 = vpop.f32.mrf.mxu0
    %v927 = vadd.f32 0.0, %v926
    %v928 = vpop.f32.mrf.mxu0
    %929 = vdwg.mxu0
    %930 = vmatpush.bf16.msra.mxu0 0
    %931 = vmatpush.bf16.msra.mxu0 0
    %932 = vmatpush.bf16.msra.mxu0 0
    %933 = vmatpush.bf16.msra.mxu0 0
    %934 = vmatpush.bf16.msra.mxu0 %v686
    %935 = vmatpush.bf16.msra.mxu0 %v684
    %936 = vmatpush.bf16.msra.mxu0 %v682
    %937 = vmatpush.bf16.msra.mxu0 %v680
    %938 = vmatmul.bf16.gmra.mxu0 %v838
    %v939 = vpop.f32.mrf.mxu0
    %v940 = vadd.f32 0.0, %v939
    %v941 = vpop.f32.mrf.mxu0
    %942 = vdwg.mxu0
    %944 = vrot.lane.b32.xlu0 %v916, 64
    %v945 = vpop.permute.xlu0 %944
    %v947 = vsel %vm188, %v945, 0
    %949 = vmatpush.bf16.msra.mxu0 0
    %950 = vmatpush.bf16.msra.mxu0 0
    %951 = vmatpush.bf16.msra.mxu0 0
    %952 = vmatpush.bf16.msra.mxu0 0
    %953 = vmatpush.bf16.msra.mxu0 %v346
    %954 = vmatpush.bf16.msra.mxu0 %v344
    %955 = vmatpush.bf16.msra.mxu0 %v342
    %956 = vmatpush.bf16.msra.mxu0 %v340
    %957 = vmatmul.bf16.gmra.mxu0 %v947
    %v958 = vpop.f32.mrf.mxu0
    %v959 = vadd.f32 %v927, %v958
    %v960 = vpop.f32.mrf.mxu0
    %961 = vdwg.mxu0
    %962 = vmatpush.bf16.msra.mxu0 0
    %963 = vmatpush.bf16.msra.mxu0 0
    %964 = vmatpush.bf16.msra.mxu0 0
    %965 = vmatpush.bf16.msra.mxu0 0
    %966 = vmatpush.bf16.msra.mxu0 %v347
    %967 = vmatpush.bf16.msra.mxu0 %v345
    %968 = vmatpush.bf16.msra.mxu0 %v343
    %969 = vmatpush.bf16.msra.mxu0 %v341
    %970 = vmatmul.bf16.gmra.mxu0 %v947
    %v971 = vpop.f32.mrf.mxu0
    %v972 = vadd.f32 %v940, %v971
    %v973 = vpop.f32.mrf.mxu0
    %974 = vdwg.mxu0
    %v975 = vadd.f32 %v959, %v309
    %v976 = vadd.f32 %v972, %v310
    %v977 = vxor.u32 %v975, 2147483648
    %v978 = vmul.f32 %v977, 1.442695
    %v979 = vpow.pop %v978
    %v980 = vadd.f32 %v979, 1.0
    %v981 = vrcp.pop %v980
    %v982 = vmul.f32 %v980, %v981
    %v983 = vsub.f32 1.0, %v982
    %v984 = vmul.f32 %v981, %v983
    %v985 = vadd.f32 %v981, %v984
    %vm986 = vweird.f32 %v980
    %vm987 = vweird.f32 %v981
    %vm988 = vmor %vm986, %vm987
    %v989 = vsel %vm988, %v981, %v985
    %v990 = vand.u32 2147483647, %v980
    %vm991 = vcmp.eq.f32.partialorder %v990, 8.507059e+37
    %v992 = vand.u32 %v980, 2147483648
    %v993 = vor.u32 1.1754944e-38, %v992
    %v994 = vsel %vm991, %v993, %v989
    %v995 = vmul.f32 1.0, %v994
    %v996 = vtanh.pop %v976
    %v997 = vxor.u32 %v976, 2147483648
    %v998 = vmul.f32 %v997, 1.442695
    %v999 = vpow.pop %v998
    %v1000 = vadd.f32 %v999, 1.0
    %v1001 = vrcp.pop %v1000
    %v1002 = vmul.f32 %v1000, %v1001
    %v1003 = vsub.f32 1.0, %v1002
    %v1004 = vmul.f32 %v1001, %v1003
    %v1005 = vadd.f32 %v1001, %v1004
    %vm1006 = vweird.f32 %v1000
    %vm1007 = vweird.f32 %v1001
    %vm1008 = vmor %vm1006, %vm1007
    %v1009 = vsel %vm1008, %v1001, %v1005
    %v1010 = vand.u32 2147483647, %v1000
    %vm1011 = vcmp.eq.f32.partialorder %v1010, 8.507059e+37
    %v1012 = vand.u32 %v1000, 2147483648
    %v1013 = vor.u32 1.1754944e-38, %v1012
    %v1014 = vsel %vm1011, %v1013, %v1009
    %v1015 = vmul.f32 1.0, %v1014
    %v1016 = vmul.f32 %v995, %v804
    %v1017 = vmul.f32 %v995, %v996
    %1019 = vrot.lane.b32.xlu0 %v1017, 64
    %v1020 = vpop.permute.xlu0 %1019
    %v1022 = vadd.f32 %v1016, %v1020
    %v1023 = vtanh.pop %v1022
    %v1024 = vmul.f32 %v1015, %v1023
    %v1025 = vpack.c.bf16 %v1024, %v1024
    %v1026 = vld [vmem:[%s13] sm:$0xf]
    %v1027 = vld [vmem:[%s13 + $0x4] sm:$0xf]
    %v1028 = vld [vmem:[%s13 + $0x8] sm:$0xf]
    %v1029 = vld [vmem:[%s13 + $0xc] sm:$0xf]
    %v1030 = vld [vmem:[%s13 + $0x10] sm:$0xf]
    %v1031 = vld [vmem:[%s13 + $0x14] sm:$0xf]
    %v1032 = vld [vmem:[%s13 + $0x18] sm:$0xf]
    %v1033 = vld [vmem:[%s13 + $0x1c] sm:$0xf]
    %v1034 = vld [vmem:[%s14] sm:$0x1]
    %v1036 = vperm.slane %v1034, 0
    %1039 = vrot.lane.b32.xlu0 %v1025, 64
    %v1040 = vpop.permute.xlu0 %1039
    %v1049 = vunpack.c.l.b16 %v1026
    %v1050 = vunpack.c.l.b16 %v1027
    %v1051 = vunpack.c.l.b16 %v1028
    %v1052 = vunpack.c.l.b16 %v1029
    %v1053 = vunpack.c.l.b16 %v1030
    %v1054 = vunpack.c.l.b16 %v1031
    %v1055 = vunpack.c.l.b16 %v1032
    %v1056 = vunpack.c.l.b16 %v1033
    %v1057 = vpack.c.b16 %v1050, %v1049
    %v1058 = vpack.c.b16 %v1052, %v1051
    %v1059 = vpack.c.b16 %v1054, %v1053
    %v1060 = vpack.c.b16 %v1056, %v1055
    %v1066 = vsel %vm188, %v1040, 0
    %1068 = vmatpush.bf16.msra.mxu0 0
    %1069 = vmatpush.bf16.msra.mxu0 0
    %1070 = vmatpush.bf16.msra.mxu0 0
    %1071 = vmatpush.bf16.msra.mxu0 0
    %1072 = vmatpush.bf16.msra.mxu0 %v1060
    %1073 = vmatpush.bf16.msra.mxu0 %v1059
    %1074 = vmatpush.bf16.msra.mxu0 %v1058
    %1075 = vmatpush.bf16.msra.mxu0 %v1057
    %1076 = vmatmul.bf16.gmra.mxu0 %v1066
    %v1077 = vpop.f32.mrf.mxu0
    %v1078 = vadd.f32 %v1036, %v1077
    %v1079 = vpop.f32.mrf.mxu0
    %1080 = vdwg.mxu0
    %v1081 = vpack.c.bf16 %v1078, %v1078
    %v1082 = vld [vmem:[%s15] sm:$0x1]
    %v1083 = vld [vmem:[%s16] sm:$0x1]
    %v1085 = vperm.slane %v1083, 0
    %v1088 = vsel %vm217, %v1081, 0
    %v1091 = vsel %vm221, %v1082, 0
    %1093 = vmatpush.bf16.msra.mxu0 0
    %1094 = vmatpush.bf16.msra.mxu0 0
    %1095 = vmatpush.bf16.msra.mxu0 0
    %1096 = vmatpush.bf16.msra.mxu0 0
    %1097 = vmatpush.bf16.msra.mxu0 0
    %1098 = vmatpush.bf16.msra.mxu0 0
    %1099 = vmatpush.bf16.msra.mxu0 0
    %1100 = vmatpush.bf16.msra.mxu0 %v1091
    %1101 = vmatmul.bf16.gmra.mxu0 %v1088
    %v1102 = vpop.f32.mrf.mxu0
    %v1103 = vadd.f32 %v1085, %v1102
    %v1104 = vpop.f32.mrf.mxu0
    %1105 = vdwg.mxu0
    %v1106 = vmax.f32 %v1103, 0.0
    %v1107 = vpack.c.bf16 %v1106, %v1106
    %v1108 = vld [vmem:[%s17] sm:$0xf]
    %v1109 = vld [vmem:[%s17 + $0x4] sm:$0xf]
    %v1110 = vld [vmem:[%s17 + $0x8] sm:$0xf]
    %v1111 = vld [vmem:[%s17 + $0xc] sm:$0xf]
    %v1112 = vld [vmem:[%s17 + $0x10] sm:$0xf]
    %v1113 = vld [vmem:[%s17 + $0x14] sm:$0xf]
    %v1114 = vld [vmem:[%s17 + $0x18] sm:$0xf]
    %v1115 = vld [vmem:[%s17 + $0x1c] sm:$0xf]
    %v1116 = vld [vmem:[%s18] sm:$0x1]
    %v1118 = vperm.slane %v1116, 0
    %v1128 = vunpack.c.l.b16 %v1108
    %v1129 = vunpack.c.l.b16 %v1109
    %v1130 = vunpack.c.l.b16 %v1110
    %v1131 = vunpack.c.l.b16 %v1111
    %v1132 = vunpack.c.l.b16 %v1112
    %v1133 = vunpack.c.l.b16 %v1113
    %v1134 = vunpack.c.l.b16 %v1114
    %v1135 = vunpack.c.l.b16 %v1115
    %v1136 = vpack.c.b16 %v1129, %v1128
    %v1137 = vpack.c.b16 %v1131, %v1130
    %v1138 = vpack.c.b16 %v1133, %v1132
    %v1139 = vpack.c.b16 %v1135, %v1134
    %v1145 = vsel %vm188, %v1107, 0
    %1147 = vmatpush.bf16.msra.mxu0 0
    %1148 = vmatpush.bf16.msra.mxu0 0
    %1149 = vmatpush.bf16.msra.mxu0 0
    %1150 = vmatpush.bf16.msra.mxu0 0
    %1151 = vmatpush.bf16.msra.mxu0 %v1139
    %1152 = vmatpush.bf16.msra.mxu0 %v1138
    %1153 = vmatpush.bf16.msra.mxu0 %v1137
    %1154 = vmatpush.bf16.msra.mxu0 %v1136
    %1155 = vmatmul.bf16.gmra.mxu0 %v1145
    %v1156 = vpop.f32.mrf.mxu0
    %v1157 = vadd.f32 %v1118, %v1156
    %v1158 = vpop.f32.mrf.mxu0
    %1159 = vdwg.mxu0
    %1160 = vst.msk [vmem:[#allocation8] sm:$0xff] %vm133, %v1157
    // Predicated region
    $region90: #{tpu_custom_call.1} parent=1 // pred_check
      _
    $region91: #{tpu_custom_call.1} parent=1 // pred_check_branch
      %1162 = sbr.rel (0) target = $region93
    $region92: #{tpu_custom_call.1} parent=1 // pred_region
      %1164 = vsyncadd [#allocation4], 0
      %s1166 = sshll.u32 [#allocation8], 4
      %s1167 = int_to_ptr.vmem [resolvable:$true] %s1166
      %s1168 = sshll.u32 %s19, 4
      %s1169 = int_to_ptr.hbm [resolvable:$true] %s1168
      %1171 = dma.vmem_to_hbm [thread:$0]  %s1167, 128, %s1169, [#allocation4]
    $region93: #{tpu_custom_call.1} parent=1 // pred_fallthru
      _
    // Predicated region
    $region94: #{tpu_custom_call.1} parent=1 // pred_check
      _
    $region95: #{tpu_custom_call.1} parent=1 // pred_check_branch
      %1173 = sbr.rel (0) target = $region97
    $region96: #{tpu_custom_call.1} parent=1 // pred_region
      %1175 = dma.done [#allocation4], 128
    $region97: #{tpu_custom_call.1} parent=1 // pred_fallthru
      _
    %1176 = vsyncpa [#allocation3], 1
    %1177 = vsyncpa [#allocation6], 1
    %1178 = vsyncpa [#allocation4], 1

</llo_original>
